<compile_context>
chip_gen: v7x
topology: tpu7x:2x2x1
jax: 0.10.0
libtpu: 0.0.40
codegen_flags: <defaults>
</compile_context>

<pallas_src>
import numpy as np
import jax
import jax.numpy as jnp
from jax.experimental import pallas as pl
from jax.experimental.pallas import tpu as pltpu

# (in_features, out_features) per layer; tanh after every layer except the last
# of the encoder (index 4) and the last of the decoder (index 9).
ENCODER_DIMS = [(256, 256), (256, 64), (64, 32), (32, 16), (16, 3)]
DECODER_DIMS = [(3, 16), (16, 32), (32, 64), (64, 128), (128, 256)]
ALL_DIMS = ENCODER_DIMS + DECODER_DIMS
N_LAYERS = len(ALL_DIMS)
N_ENC = len(ENCODER_DIMS)
TANH_LAYERS = {0, 1, 2, 3, 5, 6, 7, 8}

FEAT = 256                       # input width / max padded width
ENC_DIM = ENCODER_DIMS[-1][1]    # 3 (true encoder width)
ENC_PAD = 128                    # lane-dense padded encoder output width
DEC_DIM = DECODER_DIMS[-1][1]    # 256


def _round_up(v, m):
    return ((v + m - 1) // m) * m


# Static per-layer padded (K, N): multiples of 128 -> ref slices are tile-aligned
# and free.  Chain is consistent: PAD_DIMS[i][1] == PAD_DIMS[i+1][0].
PAD_DIMS = [(_round_up(fin, 128), _round_up(fout, 128)) for fin, fout in ALL_DIMS]


def _make_kernel(tile, act_dtype, split):
    """Build the fused 10-layer kernel specialized for tile size / dtype / split."""
    n_half = 2 if split else 1
    half = tile // n_half

    def kernel(x_ref, w_ref, b_ref, enc_ref, dec_ref):
        # x_ref: (tile, 256) f32; w_ref: (10, 256, 256) bf16; b_ref: (10, 1, 256) f32
        halves = [x_ref[pl.ds(hi * half, half), :] for hi in range(n_half)]
        for li in range(N_LAYERS):                        # unrolled at trace time
            kp, npad = PAD_DIMS[li]
            w = w_ref[li, :kp, :npad]                     # (kp, npad) bf16, static slice
            b32 = b_ref[li, :, :npad]                     # (1, npad)  f32, static slice

            # Issue both half-tile matmuls before either epilogue so the MXU pushes
            # of one half can overlap the VPU/EUP epilogue of the other half.
            s = [jnp.dot(h.astype(jnp.bfloat16), w,
                         preferred_element_type=jnp.float32)
                 for h in halves]

            nxt = []
            for hi, sv in enumerate(s):
                if li == N_ENC - 1:
                    # Encoder output layer (no tanh): keep f32 accum + f32 bias
                    # for the stored result; lanes >= 3 are exactly zero.
                    out32 = sv + b32
                    enc_ref[pl.ds(hi * half, half), :] = out32.astype(enc_ref.dtype)
                    nxt.append(out32.astype(act_dtype))
                elif li == N_LAYERS - 1:
                    # Decoder output layer (no tanh): f32 accum + f32 bias.
                    out32 = sv + b32
                    dec_ref[pl.ds(hi * half, half), :] = out32.astype(dec_ref.dtype)
                else:
                    # Hidden layer epilogue in act_dtype (bf16 on v6e/v7x, f32 on v5e).
                    v = sv.astype(act_dtype) + b32.astype(act_dtype)
                    nxt.append(jnp.tanh(v))
            halves = nxt

    return kernel


def init_params(key):
    """PyTorch-default-style uniform init, deterministic from `key`."""
    params = []
    for (fin, fout) in ALL_DIMS:
        key, kw, kb = jax.random.split(key, 3)
        bound = 1.0 / (fin ** 0.5)
        w = jax.random.uniform(kw, (fin, fout), jnp.float32, -bound, bound)
        b = jax.random.uniform(kb, (1, fout), jnp.float32, -bound, bound)
        params.append(w)
        params.append(b)
    return params


def pack_params(params):
    """Zero-pad and stack weights/biases into two device slabs.

    Done ONCE at init time: packing happens in numpy on host, then a single
    transfer per slab (no per-forward .at[].set dispatch chain).
    """
    w_np = np.zeros((N_LAYERS, FEAT, FEAT), np.float32)
    b_np = np.zeros((N_LAYERS, 1, FEAT), np.float32)
    for li, (fin, fout) in enumerate(ALL_DIMS):
        w_np[li, :fin, :fout] = np.asarray(params[2 * li], np.float32)
        b_np[li, 0, :fout] = np.asarray(params[2 * li + 1], np.float32).reshape(-1)
    w_slab = jnp.asarray(w_np).astype(jnp.bfloat16)   # (10, 256, 256) bf16
    b_slab = jnp.asarray(b_np)                        # (10, 1, 256)   f32
    return w_slab, b_slab


def _tpu_flags():
    """Chip-generation flags (best effort; safe fallbacks if detection fails)."""
    is_v5 = False
    is_v7 = False
    try:
        kind = jax.devices()[0].device_kind.lower()
        is_v5 = "v5" in kind
        is_v7 = "v7" in kind
    except Exception:
        pass
    return is_v5, is_v7


def _pick_batch_tile(B, requested, prefer_two_steps):
    # Validate a user-provided tile: must divide B and be sublane-aligned
    # (or equal the full batch); otherwise fall back to the auto choice.
    if requested is not None and B % requested == 0 and (requested % 8 == 0 or requested == B):
        return requested
    t = min(1024, B)                 # big M tile: fill MXU rows, amortize step cost
    if prefer_two_steps and B >= 32 and B // t < 2:
        t = B // 2                   # only on v7x (2 TensorCores) keep >= 2 grid steps
    t = (t // 16) * 16               # multiple of 16 -> enables two-half interleave
    if t == 0 or B % t != 0:
        t = B                        # single grid step over the whole batch
    return t


def autoencoder_forward(x, w_slab, b_slab, *, batch_tile=None):
    B, F_in = x.shape
    assert F_in == FEAT

    is_v5, is_v7 = _tpu_flags()
    act_dtype = jnp.float32 if is_v5 else jnp.bfloat16   # bf16 epilogue on v6e/v7x
    tile = _pick_batch_tile(B, batch_tile, prefer_two_steps=is_v7)
    split = (tile >= 16) and (tile % 16 == 0)

    kernel = _make_kernel(tile, act_dtype, split)

    in_specs = [
        pl.BlockSpec((tile, FEAT), lambda i: (i, 0)),                # x tile (streams)
        pl.BlockSpec((N_LAYERS, FEAT, FEAT), lambda i: (0, 0, 0)),   # weights (resident)
        pl.BlockSpec((N_LAYERS, 1, FEAT), lambda i: (0, 0, 0)),      # biases  (resident)
    ]
    out_specs = [
        pl.BlockSpec((tile, ENC_PAD), lambda i: (i, 0)),             # padded encoder out
        pl.BlockSpec((tile, DEC_DIM), lambda i: (i, 0)),             # decoder out
    ]
    out_shape = (
        jax.ShapeDtypeStruct((B, ENC_PAD), jnp.float32),
        jax.ShapeDtypeStruct((B, DEC_DIM), jnp.float32),
    )

    enc_pad, dec = pl.pallas_call(
        kernel,
        out_shape=out_shape,
        grid=(B // tile,),
        in_specs=in_specs,
        out_specs=out_specs,
        compiler_params=pltpu.CompilerParams(
            dimension_semantics=("parallel",)
        ),
    )(x, w_slab, b_slab)

    return enc_pad[:, :ENC_DIM], dec


def autoencoder_ref(x, params):
    """Pure-JAX f32 reference for correctness checking."""
    h = x.astype(jnp.float32)
    enc = None
    for li in range(N_LAYERS):
        w = params[2 * li]
        b = params[2 * li + 1]
        h = h @ w + b
        if li in TANH_LAYERS:
            h = jnp.tanh(h)
        if li == N_ENC - 1:
            enc = h
    return enc, h


if __name__ == "__main__":
    key = jax.random.PRNGKey(0)
    key_x, key_p = jax.random.split(key)

    B = 64
    x = jax.random.normal(key_x, (B, FEAT), dtype=jnp.float32)
    params = init_params(key_p)

    # Pack once at init (hoisted out of the forward path).
    w_slab, b_slab = pack_params(params)
    jax.block_until_ready((w_slab, b_slab))

    enc, dec = autoencoder_forward(x, w_slab, b_slab)
    jax.block_until_ready((enc, dec))

    enc_ref, dec_ref = autoencoder_ref(x, params)
    assert enc.shape == (B, ENC_DIM) and dec.shape == (B, DEC_DIM)
    # bf16 MXU (+ bf16 epilogue on v6e/v7x) -> relaxed tolerance vs f32 reference
    assert jnp.allclose(enc, enc_ref, atol=2e-2, rtol=2e-2)
    assert jnp.allclose(dec, dec_ref, atol=2e-2, rtol=2e-2)

    print("KERNEL_OK")
</pallas_src>

<mosaic_0001>
module attributes {stable_mosaic.version = 11 : i64} {
  func.func @kernel(%arg0: i32, %arg1: memref<64x256xf32, #tpu.memory_space<vmem>>, %arg2: memref<10x256x256xbf16, #tpu.memory_space<vmem>>, %arg3: memref<10x1x256xf32, #tpu.memory_space<vmem>>, %arg4: memref<64x128xf32, #tpu.memory_space<vmem>>, %arg5: memref<64x256xf32, #tpu.memory_space<vmem>>) attributes {dimension_semantics = [#tpu.dimension_semantics<parallel>], iteration_bounds = array<i64: 1>, scalar_prefetch = 0 : i64, scratch_operands = 0 : i64, tpu.core_type = #tpu.core_type<tc>, window_params = [{transform_indices = @transform_0, window_bounds = array<i64: 64, 256>}, {pipeline_mode = #tpu.pipeline_mode<synchronous>, transform_indices = @transform_1, window_bounds = array<i64: 10, 256, 256>}, {pipeline_mode = #tpu.pipeline_mode<synchronous>, transform_indices = @transform_2, window_bounds = array<i64: 10, 1, 256>}, {transform_indices = @transform_3, window_bounds = array<i64: 64, 128>}, {transform_indices = @transform_4, window_bounds = array<i64: 64, 256>}]} {
    %c0 = arith.constant 0 : index
    %c0_0 = arith.constant 0 : index
    %0 = vector.load %arg1[%c0, %c0_0] : memref<64x256xf32, #tpu.memory_space<vmem>>, vector<32x256xf32>
    %c32 = arith.constant 32 : index
    %c0_1 = arith.constant 0 : index
    %1 = vector.load %arg1[%c32, %c0_1] : memref<64x256xf32, #tpu.memory_space<vmem>>, vector<32x256xf32>
    %c0_2 = arith.constant 0 : index
    %c0_3 = arith.constant 0 : index
    %c0_4 = arith.constant 0 : index
    %2 = vector.load %arg2[%c0_2, %c0_3, %c0_4] : memref<10x256x256xbf16, #tpu.memory_space<vmem>>, vector<1x256x256xbf16>
    %3 = vector.shape_cast %2 : vector<1x256x256xbf16> to vector<256x256xbf16>
    %c0_5 = arith.constant 0 : index
    %c0_6 = arith.constant 0 : index
    %c0_7 = arith.constant 0 : index
    %4 = vector.load %arg3[%c0_5, %c0_6, %c0_7] : memref<10x1x256xf32, #tpu.memory_space<vmem>>, vector<1x1x256xf32>
    %5 = vector.shape_cast %4 : vector<1x1x256xf32> to vector<1x256xf32>
    %6 = arith.truncf %0 : vector<32x256xf32> to vector<32x256xbf16>
    %cst = arith.constant dense<0.000000e+00> : vector<32x256xf32>
    %7 = tpu.matmul %6, %3, %cst {dimension_numbers = #tpu.dot_dimension_numbers<[1], [0], [0], [1], [0, 0, 1, 1], [], []>} : vector<32x256xbf16>, vector<256x256xbf16>, vector<32x256xf32> -> vector<32x256xf32>
    %8 = arith.truncf %1 : vector<32x256xf32> to vector<32x256xbf16>
    %cst_8 = arith.constant dense<0.000000e+00> : vector<32x256xf32>
    %9 = tpu.matmul %8, %3, %cst_8 {dimension_numbers = #tpu.dot_dimension_numbers<[1], [0], [0], [1], [0, 0, 1, 1], [], []>} : vector<32x256xbf16>, vector<256x256xbf16>, vector<32x256xf32> -> vector<32x256xf32>
    %10 = arith.truncf %7 : vector<32x256xf32> to vector<32x256xbf16>
    %11 = arith.truncf %5 : vector<1x256xf32> to vector<1x256xbf16>
    %12 = vector.broadcast %11 : vector<1x256xbf16> to vector<32x256xbf16>
    %13 = arith.addf %10, %12 : vector<32x256xbf16>
    %14 = math.tanh %13 : vector<32x256xbf16>
    %15 = arith.truncf %9 : vector<32x256xf32> to vector<32x256xbf16>
    %16 = arith.truncf %5 : vector<1x256xf32> to vector<1x256xbf16>
    %17 = vector.broadcast %16 : vector<1x256xbf16> to vector<32x256xbf16>
    %18 = arith.addf %15, %17 : vector<32x256xbf16>
    %19 = math.tanh %18 : vector<32x256xbf16>
    %c1 = arith.constant 1 : index
    %c0_9 = arith.constant 0 : index
    %c0_10 = arith.constant 0 : index
    %20 = vector.load %arg2[%c1, %c0_9, %c0_10] : memref<10x256x256xbf16, #tpu.memory_space<vmem>>, vector<1x256x128xbf16>
    %21 = vector.shape_cast %20 : vector<1x256x128xbf16> to vector<256x128xbf16>
    %c1_11 = arith.constant 1 : index
    %c0_12 = arith.constant 0 : index
    %c0_13 = arith.constant 0 : index
    %22 = vector.load %arg3[%c1_11, %c0_12, %c0_13] : memref<10x1x256xf32, #tpu.memory_space<vmem>>, vector<1x1x128xf32>
    %23 = vector.shape_cast %22 : vector<1x1x128xf32> to vector<1x128xf32>
    %cst_14 = arith.constant dense<0.000000e+00> : vector<32x128xf32>
    %24 = tpu.matmul %14, %21, %cst_14 {dimension_numbers = #tpu.dot_dimension_numbers<[1], [0], [0], [1], [0, 0, 1, 1], [], []>} : vector<32x256xbf16>, vector<256x128xbf16>, vector<32x128xf32> -> vector<32x128xf32>
    %cst_15 = arith.constant dense<0.000000e+00> : vector<32x128xf32>
    %25 = tpu.matmul %19, %21, %cst_15 {dimension_numbers = #tpu.dot_dimension_numbers<[1], [0], [0], [1], [0, 0, 1, 1], [], []>} : vector<32x256xbf16>, vector<256x128xbf16>, vector<32x128xf32> -> vector<32x128xf32>
    %26 = arith.truncf %24 : vector<32x128xf32> to vector<32x128xbf16>
    %27 = arith.truncf %23 : vector<1x128xf32> to vector<1x128xbf16>
    %28 = vector.broadcast %27 : vector<1x128xbf16> to vector<32x128xbf16>
    %29 = arith.addf %26, %28 : vector<32x128xbf16>
    %30 = math.tanh %29 : vector<32x128xbf16>
    %31 = arith.truncf %25 : vector<32x128xf32> to vector<32x128xbf16>
    %32 = arith.truncf %23 : vector<1x128xf32> to vector<1x128xbf16>
    %33 = vector.broadcast %32 : vector<1x128xbf16> to vector<32x128xbf16>
    %34 = arith.addf %31, %33 : vector<32x128xbf16>
    %35 = math.tanh %34 : vector<32x128xbf16>
    %c2 = arith.constant 2 : index
    %c0_16 = arith.constant 0 : index
    %c0_17 = arith.constant 0 : index
    %36 = vector.load %arg2[%c2, %c0_16, %c0_17] : memref<10x256x256xbf16, #tpu.memory_space<vmem>>, vector<1x128x128xbf16>
    %37 = vector.shape_cast %36 : vector<1x128x128xbf16> to vector<128x128xbf16>
    %c2_18 = arith.constant 2 : index
    %c0_19 = arith.constant 0 : index
    %c0_20 = arith.constant 0 : index
    %38 = vector.load %arg3[%c2_18, %c0_19, %c0_20] : memref<10x1x256xf32, #tpu.memory_space<vmem>>, vector<1x1x128xf32>
    %39 = vector.shape_cast %38 : vector<1x1x128xf32> to vector<1x128xf32>
    %cst_21 = arith.constant dense<0.000000e+00> : vector<32x128xf32>
    %40 = tpu.matmul %30, %37, %cst_21 {dimension_numbers = #tpu.dot_dimension_numbers<[1], [0], [0], [1], [0, 0, 1, 1], [], []>} : vector<32x128xbf16>, vector<128x128xbf16>, vector<32x128xf32> -> vector<32x128xf32>
    %cst_22 = arith.constant dense<0.000000e+00> : vector<32x128xf32>
    %41 = tpu.matmul %35, %37, %cst_22 {dimension_numbers = #tpu.dot_dimension_numbers<[1], [0], [0], [1], [0, 0, 1, 1], [], []>} : vector<32x128xbf16>, vector<128x128xbf16>, vector<32x128xf32> -> vector<32x128xf32>
    %42 = arith.truncf %40 : vector<32x128xf32> to vector<32x128xbf16>
    %43 = arith.truncf %39 : vector<1x128xf32> to vector<1x128xbf16>
    %44 = vector.broadcast %43 : vector<1x128xbf16> to vector<32x128xbf16>
    %45 = arith.addf %42, %44 : vector<32x128xbf16>
    %46 = math.tanh %45 : vector<32x128xbf16>
    %47 = arith.truncf %41 : vector<32x128xf32> to vector<32x128xbf16>
    %48 = arith.truncf %39 : vector<1x128xf32> to vector<1x128xbf16>
    %49 = vector.broadcast %48 : vector<1x128xbf16> to vector<32x128xbf16>
    %50 = arith.addf %47, %49 : vector<32x128xbf16>
    %51 = math.tanh %50 : vector<32x128xbf16>
    %c3 = arith.constant 3 : index
    %c0_23 = arith.constant 0 : index
    %c0_24 = arith.constant 0 : index
    %52 = vector.load %arg2[%c3, %c0_23, %c0_24] : memref<10x256x256xbf16, #tpu.memory_space<vmem>>, vector<1x128x128xbf16>
    %53 = vector.shape_cast %52 : vector<1x128x128xbf16> to vector<128x128xbf16>
    %c3_25 = arith.constant 3 : index
    %c0_26 = arith.constant 0 : index
    %c0_27 = arith.constant 0 : index
    %54 = vector.load %arg3[%c3_25, %c0_26, %c0_27] : memref<10x1x256xf32, #tpu.memory_space<vmem>>, vector<1x1x128xf32>
    %55 = vector.shape_cast %54 : vector<1x1x128xf32> to vector<1x128xf32>
    %cst_28 = arith.constant dense<0.000000e+00> : vector<32x128xf32>
    %56 = tpu.matmul %46, %53, %cst_28 {dimension_numbers = #tpu.dot_dimension_numbers<[1], [0], [0], [1], [0, 0, 1, 1], [], []>} : vector<32x128xbf16>, vector<128x128xbf16>, vector<32x128xf32> -> vector<32x128xf32>
    %cst_29 = arith.constant dense<0.000000e+00> : vector<32x128xf32>
    %57 = tpu.matmul %51, %53, %cst_29 {dimension_numbers = #tpu.dot_dimension_numbers<[1], [0], [0], [1], [0, 0, 1, 1], [], []>} : vector<32x128xbf16>, vector<128x128xbf16>, vector<32x128xf32> -> vector<32x128xf32>
    %58 = arith.truncf %56 : vector<32x128xf32> to vector<32x128xbf16>
    %59 = arith.truncf %55 : vector<1x128xf32> to vector<1x128xbf16>
    %60 = vector.broadcast %59 : vector<1x128xbf16> to vector<32x128xbf16>
    %61 = arith.addf %58, %60 : vector<32x128xbf16>
    %62 = math.tanh %61 : vector<32x128xbf16>
    %63 = arith.truncf %57 : vector<32x128xf32> to vector<32x128xbf16>
    %64 = arith.truncf %55 : vector<1x128xf32> to vector<1x128xbf16>
    %65 = vector.broadcast %64 : vector<1x128xbf16> to vector<32x128xbf16>
    %66 = arith.addf %63, %65 : vector<32x128xbf16>
    %67 = math.tanh %66 : vector<32x128xbf16>
    %c4 = arith.constant 4 : index
    %c0_30 = arith.constant 0 : index
    %c0_31 = arith.constant 0 : index
    %68 = vector.load %arg2[%c4, %c0_30, %c0_31] : memref<10x256x256xbf16, #tpu.memory_space<vmem>>, vector<1x128x128xbf16>
    %69 = vector.shape_cast %68 : vector<1x128x128xbf16> to vector<128x128xbf16>
    %c4_32 = arith.constant 4 : index
    %c0_33 = arith.constant 0 : index
    %c0_34 = arith.constant 0 : index
    %70 = vector.load %arg3[%c4_32, %c0_33, %c0_34] : memref<10x1x256xf32, #tpu.memory_space<vmem>>, vector<1x1x128xf32>
    %71 = vector.shape_cast %70 : vector<1x1x128xf32> to vector<1x128xf32>
    %cst_35 = arith.constant dense<0.000000e+00> : vector<32x128xf32>
    %72 = tpu.matmul %62, %69, %cst_35 {dimension_numbers = #tpu.dot_dimension_numbers<[1], [0], [0], [1], [0, 0, 1, 1], [], []>} : vector<32x128xbf16>, vector<128x128xbf16>, vector<32x128xf32> -> vector<32x128xf32>
    %cst_36 = arith.constant dense<0.000000e+00> : vector<32x128xf32>
    %73 = tpu.matmul %67, %69, %cst_36 {dimension_numbers = #tpu.dot_dimension_numbers<[1], [0], [0], [1], [0, 0, 1, 1], [], []>} : vector<32x128xbf16>, vector<128x128xbf16>, vector<32x128xf32> -> vector<32x128xf32>
    %74 = vector.broadcast %71 : vector<1x128xf32> to vector<32x128xf32>
    %75 = arith.addf %72, %74 : vector<32x128xf32>
    %c0_37 = arith.constant 0 : index
    %c0_38 = arith.constant 0 : index
    %76 = vector.load %arg4[%c0_37, %c0_38] : memref<64x128xf32, #tpu.memory_space<vmem>>, vector<32x128xf32>
    tpu.vector_store %arg4[%c0_37, %c0_38], %75 {strides = array<i32>} : memref<64x128xf32, #tpu.memory_space<vmem>>, vector<32x128xf32>,
    %77 = arith.truncf %75 : vector<32x128xf32> to vector<32x128xbf16>
    %78 = vector.broadcast %71 : vector<1x128xf32> to vector<32x128xf32>
    %79 = arith.addf %73, %78 : vector<32x128xf32>
    %c32_39 = arith.constant 32 : index
    %c0_40 = arith.constant 0 : index
    %80 = vector.load %arg4[%c32_39, %c0_40] : memref<64x128xf32, #tpu.memory_space<vmem>>, vector<32x128xf32>
    tpu.vector_store %arg4[%c32_39, %c0_40], %79 {strides = array<i32>} : memref<64x128xf32, #tpu.memory_space<vmem>>, vector<32x128xf32>,
    %81 = arith.truncf %79 : vector<32x128xf32> to vector<32x128xbf16>
    %c5 = arith.constant 5 : index
    %c0_41 = arith.constant 0 : index
    %c0_42 = arith.constant 0 : index
    %82 = vector.load %arg2[%c5, %c0_41, %c0_42] : memref<10x256x256xbf16, #tpu.memory_space<vmem>>, vector<1x128x128xbf16>
    %83 = vector.shape_cast %82 : vector<1x128x128xbf16> to vector<128x128xbf16>
    %c5_43 = arith.constant 5 : index
    %c0_44 = arith.constant 0 : index
    %c0_45 = arith.constant 0 : index
    %84 = vector.load %arg3[%c5_43, %c0_44, %c0_45] : memref<10x1x256xf32, #tpu.memory_space<vmem>>, vector<1x1x128xf32>
    %85 = vector.shape_cast %84 : vector<1x1x128xf32> to vector<1x128xf32>
    %cst_46 = arith.constant dense<0.000000e+00> : vector<32x128xf32>
    %86 = tpu.matmul %77, %83, %cst_46 {dimension_numbers = #tpu.dot_dimension_numbers<[1], [0], [0], [1], [0, 0, 1, 1], [], []>} : vector<32x128xbf16>, vector<128x128xbf16>, vector<32x128xf32> -> vector<32x128xf32>
    %cst_47 = arith.constant dense<0.000000e+00> : vector<32x128xf32>
    %87 = tpu.matmul %81, %83, %cst_47 {dimension_numbers = #tpu.dot_dimension_numbers<[1], [0], [0], [1], [0, 0, 1, 1], [], []>} : vector<32x128xbf16>, vector<128x128xbf16>, vector<32x128xf32> -> vector<32x128xf32>
    %88 = arith.truncf %86 : vector<32x128xf32> to vector<32x128xbf16>
    %89 = arith.truncf %85 : vector<1x128xf32> to vector<1x128xbf16>
    %90 = vector.broadcast %89 : vector<1x128xbf16> to vector<32x128xbf16>
    %91 = arith.addf %88, %90 : vector<32x128xbf16>
    %92 = math.tanh %91 : vector<32x128xbf16>
    %93 = arith.truncf %87 : vector<32x128xf32> to vector<32x128xbf16>
    %94 = arith.truncf %85 : vector<1x128xf32> to vector<1x128xbf16>
    %95 = vector.broadcast %94 : vector<1x128xbf16> to vector<32x128xbf16>
    %96 = arith.addf %93, %95 : vector<32x128xbf16>
    %97 = math.tanh %96 : vector<32x128xbf16>
    %c6 = arith.constant 6 : index
    %c0_48 = arith.constant 0 : index
    %c0_49 = arith.constant 0 : index
    %98 = vector.load %arg2[%c6, %c0_48, %c0_49] : memref<10x256x256xbf16, #tpu.memory_space<vmem>>, vector<1x128x128xbf16>
    %99 = vector.shape_cast %98 : vector<1x128x128xbf16> to vector<128x128xbf16>
    %c6_50 = arith.constant 6 : index
    %c0_51 = arith.constant 0 : index
    %c0_52 = arith.constant 0 : index
    %100 = vector.load %arg3[%c6_50, %c0_51, %c0_52] : memref<10x1x256xf32, #tpu.memory_space<vmem>>, vector<1x1x128xf32>
    %101 = vector.shape_cast %100 : vector<1x1x128xf32> to vector<1x128xf32>
    %cst_53 = arith.constant dense<0.000000e+00> : vector<32x128xf32>
    %102 = tpu.matmul %92, %99, %cst_53 {dimension_numbers = #tpu.dot_dimension_numbers<[1], [0], [0], [1], [0, 0, 1, 1], [], []>} : vector<32x128xbf16>, vector<128x128xbf16>, vector<32x128xf32> -> vector<32x128xf32>
    %cst_54 = arith.constant dense<0.000000e+00> : vector<32x128xf32>
    %103 = tpu.matmul %97, %99, %cst_54 {dimension_numbers = #tpu.dot_dimension_numbers<[1], [0], [0], [1], [0, 0, 1, 1], [], []>} : vector<32x128xbf16>, vector<128x128xbf16>, vector<32x128xf32> -> vector<32x128xf32>
    %104 = arith.truncf %102 : vector<32x128xf32> to vector<32x128xbf16>
    %105 = arith.truncf %101 : vector<1x128xf32> to vector<1x128xbf16>
    %106 = vector.broadcast %105 : vector<1x128xbf16> to vector<32x128xbf16>
    %107 = arith.addf %104, %106 : vector<32x128xbf16>
    %108 = math.tanh %107 : vector<32x128xbf16>
    %109 = arith.truncf %103 : vector<32x128xf32> to vector<32x128xbf16>
    %110 = arith.truncf %101 : vector<1x128xf32> to vector<1x128xbf16>
    %111 = vector.broadcast %110 : vector<1x128xbf16> to vector<32x128xbf16>
    %112 = arith.addf %109, %111 : vector<32x128xbf16>
    %113 = math.tanh %112 : vector<32x128xbf16>
    %c7 = arith.constant 7 : index
    %c0_55 = arith.constant 0 : index
    %c0_56 = arith.constant 0 : index
    %114 = vector.load %arg2[%c7, %c0_55, %c0_56] : memref<10x256x256xbf16, #tpu.memory_space<vmem>>, vector<1x128x128xbf16>
    %115 = vector.shape_cast %114 : vector<1x128x128xbf16> to vector<128x128xbf16>
    %c7_57 = arith.constant 7 : index
    %c0_58 = arith.constant 0 : index
    %c0_59 = arith.constant 0 : index
    %116 = vector.load %arg3[%c7_57, %c0_58, %c0_59] : memref<10x1x256xf32, #tpu.memory_space<vmem>>, vector<1x1x128xf32>
    %117 = vector.shape_cast %116 : vector<1x1x128xf32> to vector<1x128xf32>
    %cst_60 = arith.constant dense<0.000000e+00> : vector<32x128xf32>
    %118 = tpu.matmul %108, %115, %cst_60 {dimension_numbers = #tpu.dot_dimension_numbers<[1], [0], [0], [1], [0, 0, 1, 1], [], []>} : vector<32x128xbf16>, vector<128x128xbf16>, vector<32x128xf32> -> vector<32x128xf32>
    %cst_61 = arith.constant dense<0.000000e+00> : vector<32x128xf32>
    %119 = tpu.matmul %113, %115, %cst_61 {dimension_numbers = #tpu.dot_dimension_numbers<[1], [0], [0], [1], [0, 0, 1, 1], [], []>} : vector<32x128xbf16>, vector<128x128xbf16>, vector<32x128xf32> -> vector<32x128xf32>
    %120 = arith.truncf %118 : vector<32x128xf32> to vector<32x128xbf16>
    %121 = arith.truncf %117 : vector<1x128xf32> to vector<1x128xbf16>
    %122 = vector.broadcast %121 : vector<1x128xbf16> to vector<32x128xbf16>
    %123 = arith.addf %120, %122 : vector<32x128xbf16>
    %124 = math.tanh %123 : vector<32x128xbf16>
    %125 = arith.truncf %119 : vector<32x128xf32> to vector<32x128xbf16>
    %126 = arith.truncf %117 : vector<1x128xf32> to vector<1x128xbf16>
    %127 = vector.broadcast %126 : vector<1x128xbf16> to vector<32x128xbf16>
    %128 = arith.addf %125, %127 : vector<32x128xbf16>
    %129 = math.tanh %128 : vector<32x128xbf16>
    %c8 = arith.constant 8 : index
    %c0_62 = arith.constant 0 : index
    %c0_63 = arith.constant 0 : index
    %130 = vector.load %arg2[%c8, %c0_62, %c0_63] : memref<10x256x256xbf16, #tpu.memory_space<vmem>>, vector<1x128x128xbf16>
    %131 = vector.shape_cast %130 : vector<1x128x128xbf16> to vector<128x128xbf16>
    %c8_64 = arith.constant 8 : index
    %c0_65 = arith.constant 0 : index
    %c0_66 = arith.constant 0 : index
    %132 = vector.load %arg3[%c8_64, %c0_65, %c0_66] : memref<10x1x256xf32, #tpu.memory_space<vmem>>, vector<1x1x128xf32>
    %133 = vector.shape_cast %132 : vector<1x1x128xf32> to vector<1x128xf32>
    %cst_67 = arith.constant dense<0.000000e+00> : vector<32x128xf32>
    %134 = tpu.matmul %124, %131, %cst_67 {dimension_numbers = #tpu.dot_dimension_numbers<[1], [0], [0], [1], [0, 0, 1, 1], [], []>} : vector<32x128xbf16>, vector<128x128xbf16>, vector<32x128xf32> -> vector<32x128xf32>
    %cst_68 = arith.constant dense<0.000000e+00> : vector<32x128xf32>
    %135 = tpu.matmul %129, %131, %cst_68 {dimension_numbers = #tpu.dot_dimension_numbers<[1], [0], [0], [1], [0, 0, 1, 1], [], []>} : vector<32x128xbf16>, vector<128x128xbf16>, vector<32x128xf32> -> vector<32x128xf32>
    %136 = arith.truncf %134 : vector<32x128xf32> to vector<32x128xbf16>
    %137 = arith.truncf %133 : vector<1x128xf32> to vector<1x128xbf16>
    %138 = vector.broadcast %137 : vector<1x128xbf16> to vector<32x128xbf16>
    %139 = arith.addf %136, %138 : vector<32x128xbf16>
    %140 = math.tanh %139 : vector<32x128xbf16>
    %141 = arith.truncf %135 : vector<32x128xf32> to vector<32x128xbf16>
    %142 = arith.truncf %133 : vector<1x128xf32> to vector<1x128xbf16>
    %143 = vector.broadcast %142 : vector<1x128xbf16> to vector<32x128xbf16>
    %144 = arith.addf %141, %143 : vector<32x128xbf16>
    %145 = math.tanh %144 : vector<32x128xbf16>
    %c9 = arith.constant 9 : index
    %c0_69 = arith.constant 0 : index
    %c0_70 = arith.constant 0 : index
    %146 = vector.load %arg2[%c9, %c0_69, %c0_70] : memref<10x256x256xbf16, #tpu.memory_space<vmem>>, vector<1x128x256xbf16>
    %147 = vector.shape_cast %146 : vector<1x128x256xbf16> to vector<128x256xbf16>
    %c9_71 = arith.constant 9 : index
    %c0_72 = arith.constant 0 : index
    %c0_73 = arith.constant 0 : index
    %148 = vector.load %arg3[%c9_71, %c0_72, %c0_73] : memref<10x1x256xf32, #tpu.memory_space<vmem>>, vector<1x1x256xf32>
    %149 = vector.shape_cast %148 : vector<1x1x256xf32> to vector<1x256xf32>
    %cst_74 = arith.constant dense<0.000000e+00> : vector<32x256xf32>
    %150 = tpu.matmul %140, %147, %cst_74 {dimension_numbers = #tpu.dot_dimension_numbers<[1], [0], [0], [1], [0, 0, 1, 1], [], []>} : vector<32x128xbf16>, vector<128x256xbf16>, vector<32x256xf32> -> vector<32x256xf32>
    %cst_75 = arith.constant dense<0.000000e+00> : vector<32x256xf32>
    %151 = tpu.matmul %145, %147, %cst_75 {dimension_numbers = #tpu.dot_dimension_numbers<[1], [0], [0], [1], [0, 0, 1, 1], [], []>} : vector<32x128xbf16>, vector<128x256xbf16>, vector<32x256xf32> -> vector<32x256xf32>
    %152 = vector.broadcast %149 : vector<1x256xf32> to vector<32x256xf32>
    %153 = arith.addf %150, %152 : vector<32x256xf32>
    %c0_76 = arith.constant 0 : index
    %c0_77 = arith.constant 0 : index
    %154 = vector.load %arg5[%c0_76, %c0_77] : memref<64x256xf32, #tpu.memory_space<vmem>>, vector<32x256xf32>
    tpu.vector_store %arg5[%c0_76, %c0_77], %153 {strides = array<i32>} : memref<64x256xf32, #tpu.memory_space<vmem>>, vector<32x256xf32>,
    %155 = vector.broadcast %149 : vector<1x256xf32> to vector<32x256xf32>
    %156 = arith.addf %151, %155 : vector<32x256xf32>
    %c32_78 = arith.constant 32 : index
    %c0_79 = arith.constant 0 : index
    %157 = vector.load %arg5[%c32_78, %c0_79] : memref<64x256xf32, #tpu.memory_space<vmem>>, vector<32x256xf32>
    tpu.vector_store %arg5[%c32_78, %c0_79], %156 {strides = array<i32>} : memref<64x256xf32, #tpu.memory_space<vmem>>, vector<32x256xf32>,
    return
  }
  func.func @transform_0(%arg0: i32) -> (i32, i32) {
    %c0_i32 = arith.constant 0 : i32
    %c0_i32_0 = arith.constant 0 : i32
    return %arg0, %c0_i32 : i32, i32
  }
  func.func @transform_1(%arg0: i32) -> (i32, i32, i32) {
    %c0_i32 = arith.constant 0 : i32
    %c0_i32_0 = arith.constant 0 : i32
    %c0_i32_1 = arith.constant 0 : i32
    %c0_i32_2 = arith.constant 0 : i32
    return %c0_i32, %c0_i32_0, %c0_i32_1 : i32, i32, i32
  }
  func.func @transform_2(%arg0: i32) -> (i32, i32, i32) {
    %c0_i32 = arith.constant 0 : i32
    %c0_i32_0 = arith.constant 0 : i32
    %c0_i32_1 = arith.constant 0 : i32
    %c0_i32_2 = arith.constant 0 : i32
    return %c0_i32, %c0_i32_0, %c0_i32_1 : i32, i32, i32
  }
  func.func @transform_3(%arg0: i32) -> (i32, i32) {
    %c0_i32 = arith.constant 0 : i32
    %c0_i32_0 = arith.constant 0 : i32
    return %arg0, %c0_i32 : i32, i32
  }
  func.func @transform_4(%arg0: i32) -> (i32, i32) {
    %c0_i32 = arith.constant 0 : i32
    %c0_i32_0 = arith.constant 0 : i32
    return %arg0, %c0_i32 : i32, i32
  }
}

</mosaic_0001>

<llo_original>
// kernel: tpu_custom_call.1
$region0: #{tpu_custom_call.1}
  #allocation0 [shape = 'u32[]', space=smem, size = 0x4, offset = 0x4, fixed_abs, tag = 'smem constant byte address 0x4 - core index']
  #allocation1 [shape = 'u32[144,128]{1,0:T(1,128)}', space=vmem, size = 0x12000, scoped, tag = 'internal scratch']
  %s0 = inlined_call_operand.hbm [shape: f32[64,256], index: 0, kind: input, shape index: {}]
  %s1 = inlined_call_operand.hbm [shape: bf16[10,256,256], index: 1, kind: input, shape index: {}]
  %s2 = inlined_call_operand.hbm [shape: f32[10,1,256], index: 2, kind: input, shape index: {}]
  %s3 = inlined_call_operand.hbm [shape: f32[64,128], index: 3, kind: output, shape index: {0}]
  %s4 = inlined_call_operand.hbm [shape: f32[64,256], index: 4, kind: output, shape index: {1}]
  %5 = xla_tuple %s3, %s4
  %s6 = sld [smem:[#allocation0]]
  $region42: #{tpu_custom_call.1} parent=0
    _
  %s8 = ssub.s32 1, %s6
  %s9 = scalar_select 0, %s8, %s6
  $region1: #{tpu_custom_call.1} parent=0
    #allocation2 [shape = 'u8[65536]{0}', space=vmem, size = 0x10000, scoped, tag = 'input window, operand 0, single buffered']
    #allocation3 [shape = 's32[1]{0}', space=sflag, size = 0x4, scoped, tag = 'scoped memory for tpu_custom_call.1']
    #allocation4 [shape = 's32[1]{0}', space=sflag, size = 0x4, scoped, tag = 'scoped memory for tpu_custom_call.1']
    #allocation5 [shape = 'u8[1310720]{0}', space=vmem, size = 0x140000, scoped, tag = 'input window, operand 1, single buffered']
    #allocation6 [shape = 's32[1]{0}', space=sflag, size = 0x4, scoped, tag = 'scoped memory for tpu_custom_call.1']
    #allocation7 [shape = 'u8[10240]{0}', space=vmem, size = 0x2800, scoped, tag = 'input window, operand 2, single buffered']
    #allocation8 [shape = 'u8[32768]{0}', space=vmem, size = 0x8000, scoped, tag = 'output window, operand 0, single buffered']
    #allocation9 [shape = 'u8[65536]{0}', space=vmem, size = 0x10000, scoped, tag = 'output window, operand 1, single buffered']
    #allocation10 [shape = 's32[1]{0}', space=sflag, size = 0x4, scoped, tag = 'scoped memory for tpu_custom_call.1']
    %10 = vsyncpa [#allocation3], 0
    %11 = vsyncpa [#allocation6], 0
    %12 = vsyncpa [#allocation4], 0
    %13 = vsyncpa [#allocation10], 0
    // Predicated region
    $region2: #{tpu_custom_call.1} parent=1 // pred_check
      _
    $region3: #{tpu_custom_call.1} parent=1 // pred_check_branch
      %15 = sbr.rel (0) target = $region5
    $region4: #{tpu_custom_call.1} parent=1 // pred_region
      %s17 = ssub.s32 2048, 2048
      %18 = vsyncadd [#allocation3], %s17
      %s19 = sshll.u32 [#allocation2], 4
      %s20 = int_to_ptr.vmem [resolvable:$true] %s19
      %25 = dma.hbm_to_vmem [thread:$0]  %s0, 2048, %s20, [#allocation3], 256, 256, 16
    $region5: #{tpu_custom_call.1} parent=1 // pred_fallthru
      _
    // Predicated region
    $region6: #{tpu_custom_call.1} parent=1 // pred_check
      _
    $region7: #{tpu_custom_call.1} parent=1 // pred_check_branch
      %27 = sbr.rel (0) target = $region9
    $region8: #{tpu_custom_call.1} parent=1 // pred_region
      %s29 = ssub.s32 40960, 40960
      %30 = vsyncadd [#allocation6], %s29
      %s31 = sshll.u32 [#allocation5], 4
      %s32 = int_to_ptr.vmem [resolvable:$true] %s31
      %37 = dma.hbm_to_vmem [thread:$0]  %s1, 40960, %s32, [#allocation6], 128, 128, 8
    $region9: #{tpu_custom_call.1} parent=1 // pred_fallthru
      _
    // Predicated region
    $region10: #{tpu_custom_call.1} parent=1 // pred_check
      _
    $region11: #{tpu_custom_call.1} parent=1 // pred_check_branch
      %39 = sbr.rel (0) target = $region13
    $region12: #{tpu_custom_call.1} parent=1 // pred_region
      %s41 = ssub.s32 320, 320
      %42 = vsyncadd [#allocation6], %s41
      %s43 = sshll.u32 [#allocation7], 4
      %s44 = int_to_ptr.vmem [resolvable:$true] %s43
      %49 = dma.hbm_to_vmem [thread:$0]  %s2, 320, %s44, [#allocation6], 32, 32, 2
    $region13: #{tpu_custom_call.1} parent=1 // pred_fallthru
      _
    // Predicated region
    $region14: #{tpu_custom_call.1} parent=1 // pred_check
      _
    $region15: #{tpu_custom_call.1} parent=1 // pred_check_branch
      %51 = sbr.rel (0) target = $region17
    $region16: #{tpu_custom_call.1} parent=1 // pred_region
      %52 = dma.done [#allocation3], 2048
    $region17: #{tpu_custom_call.1} parent=1 // pred_fallthru
      _
    // Predicated region
    $region18: #{tpu_custom_call.1} parent=1 // pred_check
      _
    $region19: #{tpu_custom_call.1} parent=1 // pred_check_branch
      %54 = sbr.rel (0) target = $region21
    $region20: #{tpu_custom_call.1} parent=1 // pred_region
      %55 = dma.done [#allocation6], 40960
    $region21: #{tpu_custom_call.1} parent=1 // pred_fallthru
      _
    // Predicated region
    $region22: #{tpu_custom_call.1} parent=1 // pred_check
      _
    $region23: #{tpu_custom_call.1} parent=1 // pred_check_branch
      %57 = sbr.rel (0) target = $region25
    $region24: #{tpu_custom_call.1} parent=1 // pred_region
      %58 = dma.done [#allocation6], 320
    $region25: #{tpu_custom_call.1} parent=1 // pred_fallthru
      _
    %v60 = vld [vmem:[#allocation2] sm:$0xff]
    %v61 = vld [vmem:[#allocation2 + $0x8] sm:$0xff]
    %v62 = vld [vmem:[#allocation2 + $0x10] sm:$0xff]
    %v63 = vld [vmem:[#allocation2 + $0x18] sm:$0xff]
    %v64 = vld [vmem:[#allocation2 + $0x20] sm:$0xff]
    %v65 = vld [vmem:[#allocation2 + $0x28] sm:$0xff]
    %v66 = vld [vmem:[#allocation2 + $0x30] sm:$0xff]
    %v67 = vld [vmem:[#allocation2 + $0x38] sm:$0xff]
    %v68 = vld [vmem:[#allocation2 + $0x40] sm:$0xff]
    %v69 = vld [vmem:[#allocation2 + $0x48] sm:$0xff]
    %v70 = vld [vmem:[#allocation2 + $0x50] sm:$0xff]
    %v71 = vld [vmem:[#allocation2 + $0x58] sm:$0xff]
    %v72 = vld [vmem:[#allocation2 + $0x60] sm:$0xff]
    %v73 = vld [vmem:[#allocation2 + $0x68] sm:$0xff]
    %v74 = vld [vmem:[#allocation2 + $0x70] sm:$0xff]
    %v75 = vld [vmem:[#allocation2 + $0x78] sm:$0xff]
    %v76 = vld [vmem:[#allocation5] sm:$0xff]
    %v77 = vld [vmem:[#allocation5 + $0x8] sm:$0xff]
    %v78 = vld [vmem:[#allocation5 + $0x10] sm:$0xff]
    %v79 = vld [vmem:[#allocation5 + $0x18] sm:$0xff]
    %v80 = vld [vmem:[#allocation5 + $0x20] sm:$0xff]
    %v81 = vld [vmem:[#allocation5 + $0x28] sm:$0xff]
    %v82 = vld [vmem:[#allocation5 + $0x30] sm:$0xff]
    %v83 = vld [vmem:[#allocation5 + $0x38] sm:$0xff]
    %v84 = vld [vmem:[#allocation5 + $0x40] sm:$0xff]
    %v85 = vld [vmem:[#allocation5 + $0x48] sm:$0xff]
    %v86 = vld [vmem:[#allocation5 + $0x50] sm:$0xff]
    %v87 = vld [vmem:[#allocation5 + $0x58] sm:$0xff]
    %v88 = vld [vmem:[#allocation5 + $0x60] sm:$0xff]
    %v89 = vld [vmem:[#allocation5 + $0x68] sm:$0xff]
    %v90 = vld [vmem:[#allocation5 + $0x70] sm:$0xff]
    %v91 = vld [vmem:[#allocation5 + $0x78] sm:$0xff]
    %v92 = vld [vmem:[#allocation5 + $0x80] sm:$0xff]
    %v93 = vld [vmem:[#allocation5 + $0x88] sm:$0xff]
    %v94 = vld [vmem:[#allocation5 + $0x90] sm:$0xff]
    %v95 = vld [vmem:[#allocation5 + $0x98] sm:$0xff]
    %v96 = vld [vmem:[#allocation5 + $0xa0] sm:$0xff]
    %v97 = vld [vmem:[#allocation5 + $0xa8] sm:$0xff]
    %v98 = vld [vmem:[#allocation5 + $0xb0] sm:$0xff]
    %v99 = vld [vmem:[#allocation5 + $0xb8] sm:$0xff]
    %v100 = vld [vmem:[#allocation5 + $0xc0] sm:$0xff]
    %v101 = vld [vmem:[#allocation5 + $0xc8] sm:$0xff]
    %v102 = vld [vmem:[#allocation5 + $0xd0] sm:$0xff]
    %v103 = vld [vmem:[#allocation5 + $0xd8] sm:$0xff]
    %v104 = vld [vmem:[#allocation5 + $0xe0] sm:$0xff]
    %v105 = vld [vmem:[#allocation5 + $0xe8] sm:$0xff]
    %v106 = vld [vmem:[#allocation5 + $0xf0] sm:$0xff]
    %v107 = vld [vmem:[#allocation5 + $0xf8] sm:$0xff]
    %v108 = vld [vmem:[#allocation7] sm:$0x3]
    %v109 = vpack.c.bf16 %v62, %v60
    %v110 = vpack.c.bf16 %v63, %v61
    %v111 = vpack.c.bf16 %v66, %v64
    %v112 = vpack.c.bf16 %v67, %v65
    %v145 = vunpack.c.l.b16 %v76
    %v146 = vunpack.c.h.b16 %v76
    %v147 = vunpack.c.l.b16 %v77
    %v148 = vunpack.c.h.b16 %v77
    %v149 = vunpack.c.l.b16 %v78
    %v150 = vunpack.c.h.b16 %v78
    %v151 = vunpack.c.l.b16 %v79
    %v152 = vunpack.c.h.b16 %v79
    %v153 = vunpack.c.l.b16 %v80
    %v154 = vunpack.c.h.b16 %v80
    %v155 = vunpack.c.l.b16 %v81
    %v156 = vunpack.c.h.b16 %v81
    %v157 = vunpack.c.l.b16 %v82
    %v158 = vunpack.c.h.b16 %v82
    %v159 = vunpack.c.l.b16 %v83
    %v160 = vunpack.c.h.b16 %v83
    %v161 = vunpack.c.l.b16 %v84
    %v162 = vunpack.c.h.b16 %v84
    %v163 = vunpack.c.l.b16 %v85
    %v164 = vunpack.c.h.b16 %v85
    %v165 = vunpack.c.l.b16 %v86
    %v166 = vunpack.c.h.b16 %v86
    %v167 = vunpack.c.l.b16 %v87
    %v168 = vunpack.c.h.b16 %v87
    %v169 = vunpack.c.l.b16 %v88
    %v170 = vunpack.c.h.b16 %v88
    %v171 = vunpack.c.l.b16 %v89
    %v172 = vunpack.c.h.b16 %v89
    %v173 = vunpack.c.l.b16 %v90
    %v174 = vunpack.c.h.b16 %v90
    %v175 = vunpack.c.l.b16 %v91
    %v176 = vunpack.c.h.b16 %v91
    %v177 = vunpack.c.l.b16 %v92
    %v178 = vunpack.c.h.b16 %v92
    %v179 = vunpack.c.l.b16 %v93
    %v180 = vunpack.c.h.b16 %v93
    %v181 = vunpack.c.l.b16 %v94
    %v182 = vunpack.c.h.b16 %v94
    %v183 = vunpack.c.l.b16 %v95
    %v184 = vunpack.c.h.b16 %v95
    %v185 = vunpack.c.l.b16 %v96
    %v186 = vunpack.c.h.b16 %v96
    %v187 = vunpack.c.l.b16 %v97
    %v188 = vunpack.c.h.b16 %v97
    %v189 = vunpack.c.l.b16 %v98
    %v190 = vunpack.c.h.b16 %v98
    %v191 = vunpack.c.l.b16 %v99
    %v192 = vunpack.c.h.b16 %v99
    %v193 = vunpack.c.l.b16 %v100
    %v194 = vunpack.c.h.b16 %v100
    %v195 = vunpack.c.l.b16 %v101
    %v196 = vunpack.c.h.b16 %v101
    %v197 = vunpack.c.l.b16 %v102
    %v198 = vunpack.c.h.b16 %v102
    %v199 = vunpack.c.l.b16 %v103
    %v200 = vunpack.c.h.b16 %v103
    %v201 = vunpack.c.l.b16 %v104
    %v202 = vunpack.c.h.b16 %v104
    %v203 = vunpack.c.l.b16 %v105
    %v204 = vunpack.c.h.b16 %v105
    %v205 = vunpack.c.l.b16 %v106
    %v206 = vunpack.c.h.b16 %v106
    %v207 = vunpack.c.l.b16 %v107
    %v208 = vunpack.c.h.b16 %v107
    %v209 = vpack.c.b16 %v147, %v145
    %v210 = vpack.c.b16 %v148, %v146
    %v211 = vpack.c.b16 %v151, %v149
    %v212 = vpack.c.b16 %v152, %v150
    %v213 = vpack.c.b16 %v155, %v153
    %v214 = vpack.c.b16 %v156, %v154
    %v215 = vpack.c.b16 %v159, %v157
    %v216 = vpack.c.b16 %v160, %v158
    %v217 = vpack.c.b16 %v163, %v161
    %v218 = vpack.c.b16 %v164, %v162
    %v219 = vpack.c.b16 %v167, %v165
    %v220 = vpack.c.b16 %v168, %v166
    %v221 = vpack.c.b16 %v171, %v169
    %v222 = vpack.c.b16 %v172, %v170
    %v223 = vpack.c.b16 %v175, %v173
    %v224 = vpack.c.b16 %v176, %v174
    %v225 = vpack.c.b16 %v179, %v177
    %v226 = vpack.c.b16 %v180, %v178
    %v227 = vpack.c.b16 %v183, %v181
    %v228 = vpack.c.b16 %v184, %v182
    %v229 = vpack.c.b16 %v187, %v185
    %v230 = vpack.c.b16 %v188, %v186
    %v231 = vpack.c.b16 %v191, %v189
    %v232 = vpack.c.b16 %v192, %v190
    %v233 = vpack.c.b16 %v195, %v193
    %v234 = vpack.c.b16 %v196, %v194
    %v235 = vpack.c.b16 %v199, %v197
    %v236 = vpack.c.b16 %v200, %v198
    %v237 = vpack.c.b16 %v203, %v201
    %v238 = vpack.c.b16 %v204, %v202
    %v239 = vpack.c.b16 %v207, %v205
    %v240 = vpack.c.b16 %v208, %v206
    %273 = vmatprep.subr.bf16.mxu0 %v210
    %274 = vmatpush1.bf16.msra.mxu0 %v209
    %275 = vmatprep.subr.bf16.mxu0 %v212
    %276 = vmatpush1.bf16.msra.mxu0 %v211
    %277 = vmatprep.subr.bf16.mxu0 %v214
    %278 = vmatpush1.bf16.msra.mxu0 %v213
    %279 = vmatprep.subr.bf16.mxu0 %v216
    %280 = vmatpush1.bf16.msra.mxu0 %v215
    %281 = vmatprep.subr.bf16.mxu0 %v218
    %282 = vmatpush1.bf16.msra.mxu0 %v217
    %283 = vmatprep.subr.bf16.mxu0 %v220
    %284 = vmatpush1.bf16.msra.mxu0 %v219
    %285 = vmatprep.subr.bf16.mxu0 %v222
    %286 = vmatpush1.bf16.msra.mxu0 %v221
    %287 = vmatprep.subr.bf16.mxu0 %v224
    %288 = vmatpush1.bf16.msra.mxu0 %v223
    %289 = vmatprep.subr.bf16.mxu0 %v226
    %290 = vmatpush1.bf16.msra.mxu0 %v225
    %291 = vmatprep.subr.bf16.mxu0 %v228
    %292 = vmatpush1.bf16.msra.mxu0 %v227
    %293 = vmatprep.subr.bf16.mxu0 %v230
    %294 = vmatpush1.bf16.msra.mxu0 %v229
    %295 = vmatprep.subr.bf16.mxu0 %v232
    %296 = vmatpush1.bf16.msra.mxu0 %v231
    %297 = vmatprep.subr.bf16.mxu0 %v234
    %298 = vmatpush1.bf16.msra.mxu0 %v233
    %299 = vmatprep.subr.bf16.mxu0 %v236
    %300 = vmatpush1.bf16.msra.mxu0 %v235
    %301 = vmatprep.subr.bf16.mxu0 %v238
    %302 = vmatpush1.bf16.msra.mxu0 %v237
    %303 = vmatprep.subr.bf16.mxu0 %v240
    %304 = vmatpush1.bf16.msra.mxu0 %v239
    %305 = vmatprep.mubr.bf16.mxu0 %v110
    %306 = vmatmul.mubr.bf16.gmra.mrb[0].mxu0 %v109
    %v307 = vpop.f32.mrb[0].mxu0
    %v308 = vadd.f32 0.0, %v307
    %v309 = vpop.f32.mrb[0].mxu0
    %v310 = vadd.f32 0.0, %v309
    %v311 = vpop.f32.mrb[0].mxu0
    %v312 = vadd.f32 0.0, %v311
    %v313 = vpop.f32.mrb[0].mxu0
    %v314 = vadd.f32 0.0, %v313
    %315 = vmatprep.mubr.bf16.mxu0 %v112
    %316 = vmatmul.mubr.bf16.gmra.mrb[0].mxu0 %v111
    %v317 = vpop.f32.mrb[0].mxu0
    %v318 = vadd.f32 0.0, %v317
    %v319 = vpop.f32.mrb[0].mxu0
    %v320 = vadd.f32 0.0, %v319
    %v321 = vpop.f32.mrb[0].mxu0
    %v322 = vadd.f32 0.0, %v321
    %v323 = vpop.f32.mrb[0].mxu0
    %v324 = vadd.f32 0.0, %v323
    %325 = vdwg.mxu0
    %v326 = vpack.c.bf16 %v70, %v68
    %v327 = vpack.c.bf16 %v71, %v69
    %v328 = vpack.c.bf16 %v74, %v72
    %v329 = vpack.c.bf16 %v75, %v73
    %330 = vmatprep.subr.bf16.mxu0 %v210
    %331 = vmatpush1.bf16.msra.mxu0 %v209
    %332 = vmatprep.subr.bf16.mxu0 %v212
    %333 = vmatpush1.bf16.msra.mxu0 %v211
    %334 = vmatprep.subr.bf16.mxu0 %v214
    %335 = vmatpush1.bf16.msra.mxu0 %v213
    %336 = vmatprep.subr.bf16.mxu0 %v216
    %337 = vmatpush1.bf16.msra.mxu0 %v215
    %338 = vmatprep.subr.bf16.mxu0 %v218
    %339 = vmatpush1.bf16.msra.mxu0 %v217
    %340 = vmatprep.subr.bf16.mxu0 %v220
    %341 = vmatpush1.bf16.msra.mxu0 %v219
    %342 = vmatprep.subr.bf16.mxu0 %v222
    %343 = vmatpush1.bf16.msra.mxu0 %v221
    %344 = vmatprep.subr.bf16.mxu0 %v224
    %345 = vmatpush1.bf16.msra.mxu0 %v223
    %346 = vmatprep.subr.bf16.mxu0 %v226
    %347 = vmatpush1.bf16.msra.mxu0 %v225
    %348 = vmatprep.subr.bf16.mxu0 %v228
    %349 = vmatpush1.bf16.msra.mxu0 %v227
    %350 = vmatprep.subr.bf16.mxu0 %v230
    %351 = vmatpush1.bf16.msra.mxu0 %v229
    %352 = vmatprep.subr.bf16.mxu0 %v232
    %353 = vmatpush1.bf16.msra.mxu0 %v231
    %354 = vmatprep.subr.bf16.mxu0 %v234
    %355 = vmatpush1.bf16.msra.mxu0 %v233
    %356 = vmatprep.subr.bf16.mxu0 %v236
    %357 = vmatpush1.bf16.msra.mxu0 %v235
    %358 = vmatprep.subr.bf16.mxu0 %v238
    %359 = vmatpush1.bf16.msra.mxu0 %v237
    %360 = vmatprep.subr.bf16.mxu0 %v240
    %361 = vmatpush1.bf16.msra.mxu0 %v239
    %362 = vmatprep.mubr.bf16.mxu0 %v327
    %363 = vmatmul.mubr.bf16.gmra.mrb[0].mxu0 %v326
    %v364 = vpop.f32.mrb[0].mxu0
    %v365 = vadd.f32 0.0, %v364
    %v366 = vpop.f32.mrb[0].mxu0
    %v367 = vadd.f32 0.0, %v366
    %v368 = vpop.f32.mrb[0].mxu0
    %v369 = vadd.f32 0.0, %v368
    %v370 = vpop.f32.mrb[0].mxu0
    %v371 = vadd.f32 0.0, %v370
    %372 = vmatprep.mubr.bf16.mxu0 %v329
    %373 = vmatmul.mubr.bf16.gmra.mrb[0].mxu0 %v328
    %v374 = vpop.f32.mrb[0].mxu0
    %v375 = vadd.f32 0.0, %v374
    %v376 = vpop.f32.mrb[0].mxu0
    %v377 = vadd.f32 0.0, %v376
    %v378 = vpop.f32.mrb[0].mxu0
    %v379 = vadd.f32 0.0, %v378
    %v380 = vpop.f32.mrb[0].mxu0
    %v381 = vadd.f32 0.0, %v380
    %382 = vdwg.mxu0
    %v383 = vpack.c.bf16 %v312, %v308
    %v384 = vpack.c.bf16 %v314, %v310
    %v385 = vpack.c.bf16 %v322, %v318
    %v386 = vpack.c.bf16 %v324, %v320
    %v388 = vlaneseq
    %v389 = vshrl.u32 %v388, 7
    %v390 = vsub.s32 0, %v389
    %v391 = vrot.slane %v108, %v390
    %v392 = vlaneseq
    %v393 = vshrl.u32 %v392, 7
    %v394 = vsub.s32 1, %v393
    %v395 = vrot.slane %v108, %v394
    %v398 = vpack.c.bf16 %v391, %v391
    %v399 = vpack.c.bf16 %v395, %v395
    %v401 = vpack.i.b16 %v398, %v398
    %v403 = vlaneseq
    %v404 = vshrl.u32 %v403, 7
    %v405 = vsub.s32 0, %v404
    %v406 = vrot.slane %v401, %v405
    %v408 = vpack.i.b16 %v399, %v399
    %v410 = vlaneseq
    %v411 = vshrl.u32 %v410, 7
    %v412 = vsub.s32 0, %v411
    %v413 = vrot.slane %v408, %v412
    %v414 = vadd.bf16 %v383, %v406
    %v415 = vadd.bf16 %v384, %v413
    %v416 = vadd.bf16 %v385, %v406
    %v417 = vadd.bf16 %v386, %v413
    %v418 = vtanh.bf16.pop %v414
    %v419 = vtanh.bf16.pop %v415
    %v420 = vtanh.bf16.pop %v416
    %v421 = vtanh.bf16.pop %v417
    %v422 = vpack.c.bf16 %v369, %v365
    %v423 = vpack.c.bf16 %v371, %v367
    %v424 = vpack.c.bf16 %v379, %v375
    %v425 = vpack.c.bf16 %v381, %v377
    %v426 = vadd.bf16 %v422, %v406
    %v427 = vadd.bf16 %v423, %v413
    %v428 = vadd.bf16 %v424, %v406
    %v429 = vadd.bf16 %v425, %v413
    %v430 = vtanh.bf16.pop %v426
    %v431 = vtanh.bf16.pop %v427
    %v432 = vtanh.bf16.pop %v428
    %v433 = vtanh.bf16.pop %v429
    %s434 = scalar_lea.vmem [#allocation5], 256
    %v435 = vld [vmem:[%s434] sm:$0xf]
    %v436 = vld [vmem:[%s434 + $0x8] sm:$0xf]
    %v437 = vld [vmem:[%s434 + $0x10] sm:$0xf]
    %v438 = vld [vmem:[%s434 + $0x18] sm:$0xf]
    %v439 = vld [vmem:[%s434 + $0x20] sm:$0xf]
    %v440 = vld [vmem:[%s434 + $0x28] sm:$0xf]
    %v441 = vld [vmem:[%s434 + $0x30] sm:$0xf]
    %v442 = vld [vmem:[%s434 + $0x38] sm:$0xf]
    %v443 = vld [vmem:[%s434 + $0x40] sm:$0xf]
    %v444 = vld [vmem:[%s434 + $0x48] sm:$0xf]
    %v445 = vld [vmem:[%s434 + $0x50] sm:$0xf]
    %v446 = vld [vmem:[%s434 + $0x58] sm:$0xf]
    %v447 = vld [vmem:[%s434 + $0x60] sm:$0xf]
    %v448 = vld [vmem:[%s434 + $0x68] sm:$0xf]
    %v449 = vld [vmem:[%s434 + $0x70] sm:$0xf]
    %v450 = vld [vmem:[%s434 + $0x78] sm:$0xf]
    %v451 = vld [vmem:[%s434 + $0x80] sm:$0xf]
    %v452 = vld [vmem:[%s434 + $0x88] sm:$0xf]
    %v453 = vld [vmem:[%s434 + $0x90] sm:$0xf]
    %v454 = vld [vmem:[%s434 + $0x98] sm:$0xf]
    %v455 = vld [vmem:[%s434 + $0xa0] sm:$0xf]
    %v456 = vld [vmem:[%s434 + $0xa8] sm:$0xf]
    %v457 = vld [vmem:[%s434 + $0xb0] sm:$0xf]
    %v458 = vld [vmem:[%s434 + $0xb8] sm:$0xf]
    %v459 = vld [vmem:[%s434 + $0xc0] sm:$0xf]
    %v460 = vld [vmem:[%s434 + $0xc8] sm:$0xf]
    %v461 = vld [vmem:[%s434 + $0xd0] sm:$0xf]
    %v462 = vld [vmem:[%s434 + $0xd8] sm:$0xf]
    %v463 = vld [vmem:[%s434 + $0xe0] sm:$0xf]
    %v464 = vld [vmem:[%s434 + $0xe8] sm:$0xf]
    %v465 = vld [vmem:[%s434 + $0xf0] sm:$0xf]
    %v466 = vld [vmem:[%s434 + $0xf8] sm:$0xf]
    %s467 = scalar_lea.vmem [#allocation7], 2
    %v468 = vld [vmem:[%s467] sm:$0x1]
    %v501 = vunpack.c.l.b16 %v435
    %v502 = vunpack.c.l.b16 %v436
    %v503 = vunpack.c.l.b16 %v437
    %v504 = vunpack.c.l.b16 %v438
    %v505 = vunpack.c.l.b16 %v439
    %v506 = vunpack.c.l.b16 %v440
    %v507 = vunpack.c.l.b16 %v441
    %v508 = vunpack.c.l.b16 %v442
    %v509 = vunpack.c.l.b16 %v443
    %v510 = vunpack.c.l.b16 %v444
    %v511 = vunpack.c.l.b16 %v445
    %v512 = vunpack.c.l.b16 %v446
    %v513 = vunpack.c.l.b16 %v447
    %v514 = vunpack.c.l.b16 %v448
    %v515 = vunpack.c.l.b16 %v449
    %v516 = vunpack.c.l.b16 %v450
    %v517 = vunpack.c.l.b16 %v451
    %v518 = vunpack.c.l.b16 %v452
    %v519 = vunpack.c.l.b16 %v453
    %v520 = vunpack.c.l.b16 %v454
    %v521 = vunpack.c.l.b16 %v455
    %v522 = vunpack.c.l.b16 %v456
    %v523 = vunpack.c.l.b16 %v457
    %v524 = vunpack.c.l.b16 %v458
    %v525 = vunpack.c.l.b16 %v459
    %v526 = vunpack.c.l.b16 %v460
    %v527 = vunpack.c.l.b16 %v461
    %v528 = vunpack.c.l.b16 %v462
    %v529 = vunpack.c.l.b16 %v463
    %v530 = vunpack.c.l.b16 %v464
    %v531 = vunpack.c.l.b16 %v465
    %v532 = vunpack.c.l.b16 %v466
    %v533 = vpack.c.b16 %v502, %v501
    %v534 = vpack.c.b16 %v504, %v503
    %v535 = vpack.c.b16 %v506, %v505
    %v536 = vpack.c.b16 %v508, %v507
    %v537 = vpack.c.b16 %v510, %v509
    %v538 = vpack.c.b16 %v512, %v511
    %v539 = vpack.c.b16 %v514, %v513
    %v540 = vpack.c.b16 %v516, %v515
    %v541 = vpack.c.b16 %v518, %v517
    %v542 = vpack.c.b16 %v520, %v519
    %v543 = vpack.c.b16 %v522, %v521
    %v544 = vpack.c.b16 %v524, %v523
    %v545 = vpack.c.b16 %v526, %v525
    %v546 = vpack.c.b16 %v528, %v527
    %v547 = vpack.c.b16 %v530, %v529
    %v548 = vpack.c.b16 %v532, %v531
    %565 = vmatprep.subr.bf16.mxu0 0
    %566 = vmatpush1.bf16.msra.mxu0 %v533
    %567 = vmatprep.subr.bf16.mxu0 0
    %568 = vmatpush1.bf16.msra.mxu0 %v534
    %569 = vmatprep.subr.bf16.mxu0 0
    %570 = vmatpush1.bf16.msra.mxu0 %v535
    %571 = vmatprep.subr.bf16.mxu0 0
    %572 = vmatpush1.bf16.msra.mxu0 %v536
    %573 = vmatprep.subr.bf16.mxu0 0
    %574 = vmatpush1.bf16.msra.mxu0 %v537
    %575 = vmatprep.subr.bf16.mxu0 0
    %576 = vmatpush1.bf16.msra.mxu0 %v538
    %577 = vmatprep.subr.bf16.mxu0 0
    %578 = vmatpush1.bf16.msra.mxu0 %v539
    %579 = vmatprep.subr.bf16.mxu0 0
    %580 = vmatpush1.bf16.msra.mxu0 %v540
    %581 = vmatprep.subr.bf16.mxu0 0
    %582 = vmatpush1.bf16.msra.mxu0 %v541
    %583 = vmatprep.subr.bf16.mxu0 0
    %584 = vmatpush1.bf16.msra.mxu0 %v542
    %585 = vmatprep.subr.bf16.mxu0 0
    %586 = vmatpush1.bf16.msra.mxu0 %v543
    %587 = vmatprep.subr.bf16.mxu0 0
    %588 = vmatpush1.bf16.msra.mxu0 %v544
    %589 = vmatprep.subr.bf16.mxu0 0
    %590 = vmatpush1.bf16.msra.mxu0 %v545
    %591 = vmatprep.subr.bf16.mxu0 0
    %592 = vmatpush1.bf16.msra.mxu0 %v546
    %593 = vmatprep.subr.bf16.mxu0 0
    %594 = vmatpush1.bf16.msra.mxu0 %v547
    %595 = vmatprep.subr.bf16.mxu0 0
    %596 = vmatpush1.bf16.msra.mxu0 %v548
    %597 = vmatprep.mubr.bf16.mxu0 %v419
    %598 = vmatmul.mubr.bf16.gmra.mrb[0].mxu0 %v418
    %v599 = vpop.f32.mrb[0].mxu0
    %v600 = vadd.f32 0.0, %v599
    %v601 = vpop.f32.mrb[0].mxu0
    %v602 = vpop.f32.mrb[0].mxu0
    %v603 = vadd.f32 0.0, %v602
    %v604 = vpop.f32.mrb[0].mxu0
    %605 = vmatprep.mubr.bf16.mxu0 %v421
    %606 = vmatmul.mubr.bf16.gmra.mrb[0].mxu0 %v420
    %v607 = vpop.f32.mrb[0].mxu0
    %v608 = vadd.f32 0.0, %v607
    %v609 = vpop.f32.mrb[0].mxu0
    %v610 = vpop.f32.mrb[0].mxu0
    %v611 = vadd.f32 0.0, %v610
    %v612 = vpop.f32.mrb[0].mxu0
    %613 = vdwg.mxu0
    %614 = vmatprep.subr.bf16.mxu0 0
    %615 = vmatpush1.bf16.msra.mxu0 %v533
    %616 = vmatprep.subr.bf16.mxu0 0
    %617 = vmatpush1.bf16.msra.mxu0 %v534
    %618 = vmatprep.subr.bf16.mxu0 0
    %619 = vmatpush1.bf16.msra.mxu0 %v535
    %620 = vmatprep.subr.bf16.mxu0 0
    %621 = vmatpush1.bf16.msra.mxu0 %v536
    %622 = vmatprep.subr.bf16.mxu0 0
    %623 = vmatpush1.bf16.msra.mxu0 %v537
    %624 = vmatprep.subr.bf16.mxu0 0
    %625 = vmatpush1.bf16.msra.mxu0 %v538
    %626 = vmatprep.subr.bf16.mxu0 0
    %627 = vmatpush1.bf16.msra.mxu0 %v539
    %628 = vmatprep.subr.bf16.mxu0 0
    %629 = vmatpush1.bf16.msra.mxu0 %v540
    %630 = vmatprep.subr.bf16.mxu0 0
    %631 = vmatpush1.bf16.msra.mxu0 %v541
    %632 = vmatprep.subr.bf16.mxu0 0
    %633 = vmatpush1.bf16.msra.mxu0 %v542
    %634 = vmatprep.subr.bf16.mxu0 0
    %635 = vmatpush1.bf16.msra.mxu0 %v543
    %636 = vmatprep.subr.bf16.mxu0 0
    %637 = vmatpush1.bf16.msra.mxu0 %v544
    %638 = vmatprep.subr.bf16.mxu0 0
    %639 = vmatpush1.bf16.msra.mxu0 %v545
    %640 = vmatprep.subr.bf16.mxu0 0
    %641 = vmatpush1.bf16.msra.mxu0 %v546
    %642 = vmatprep.subr.bf16.mxu0 0
    %643 = vmatpush1.bf16.msra.mxu0 %v547
    %644 = vmatprep.subr.bf16.mxu0 0
    %645 = vmatpush1.bf16.msra.mxu0 %v548
    %646 = vmatprep.mubr.bf16.mxu0 %v431
    %647 = vmatmul.mubr.bf16.gmra.mrb[0].mxu0 %v430
    %v648 = vpop.f32.mrb[0].mxu0
    %v649 = vadd.f32 0.0, %v648
    %v650 = vpop.f32.mrb[0].mxu0
    %v651 = vpop.f32.mrb[0].mxu0
    %v652 = vadd.f32 0.0, %v651
    %v653 = vpop.f32.mrb[0].mxu0
    %654 = vmatprep.mubr.bf16.mxu0 %v433
    %655 = vmatmul.mubr.bf16.gmra.mrb[0].mxu0 %v432
    %v656 = vpop.f32.mrb[0].mxu0
    %v657 = vadd.f32 0.0, %v656
    %v658 = vpop.f32.mrb[0].mxu0
    %v659 = vpop.f32.mrb[0].mxu0
    %v660 = vadd.f32 0.0, %v659
    %v661 = vpop.f32.mrb[0].mxu0
    %662 = vdwg.mxu0
    %v663 = vpack.c.bf16 %v603, %v600
    %v664 = vpack.c.bf16 %v611, %v608
    %v665 = vpack.c.bf16 %v468, %v468
    %v667 = vpack.i.b16 %v665, %v665
    %v669 = vlaneseq
    %v670 = vshrl.u32 %v669, 7
    %v671 = vsub.s32 0, %v670
    %v672 = vrot.slane %v667, %v671
    %v673 = vadd.bf16 %v663, %v672
    %v674 = vadd.bf16 %v664, %v672
    %v675 = vtanh.bf16.pop %v673
    %v676 = vtanh.bf16.pop %v674
    %v677 = vpack.c.bf16 %v652, %v649
    %v678 = vpack.c.bf16 %v660, %v657
    %v679 = vadd.bf16 %v677, %v672
    %v680 = vadd.bf16 %v678, %v672
    %v681 = vtanh.bf16.pop %v679
    %v682 = vtanh.bf16.pop %v680
    %s683 = scalar_lea.vmem [#allocation5], 512
    %v684 = vld [vmem:[%s683] sm:$0xf]
    %v685 = vld [vmem:[%s683 + $0x8] sm:$0xf]
    %v686 = vld [vmem:[%s683 + $0x10] sm:$0xf]
    %v687 = vld [vmem:[%s683 + $0x18] sm:$0xf]
    %v688 = vld [vmem:[%s683 + $0x20] sm:$0xf]
    %v689 = vld [vmem:[%s683 + $0x28] sm:$0xf]
    %v690 = vld [vmem:[%s683 + $0x30] sm:$0xf]
    %v691 = vld [vmem:[%s683 + $0x38] sm:$0xf]
    %v692 = vld [vmem:[%s683 + $0x40] sm:$0xf]
    %v693 = vld [vmem:[%s683 + $0x48] sm:$0xf]
    %v694 = vld [vmem:[%s683 + $0x50] sm:$0xf]
    %v695 = vld [vmem:[%s683 + $0x58] sm:$0xf]
    %v696 = vld [vmem:[%s683 + $0x60] sm:$0xf]
    %v697 = vld [vmem:[%s683 + $0x68] sm:$0xf]
    %v698 = vld [vmem:[%s683 + $0x70] sm:$0xf]
    %v699 = vld [vmem:[%s683 + $0x78] sm:$0xf]
    %s700 = scalar_lea.vmem [#allocation7], 4
    %v701 = vld [vmem:[%s700] sm:$0x1]
    %v718 = vunpack.c.l.b16 %v684
    %v719 = vunpack.c.l.b16 %v685
    %v720 = vunpack.c.l.b16 %v686
    %v721 = vunpack.c.l.b16 %v687
    %v722 = vunpack.c.l.b16 %v688
    %v723 = vunpack.c.l.b16 %v689
    %v724 = vunpack.c.l.b16 %v690
    %v725 = vunpack.c.l.b16 %v691
    %v726 = vunpack.c.l.b16 %v692
    %v727 = vunpack.c.l.b16 %v693
    %v728 = vunpack.c.l.b16 %v694
    %v729 = vunpack.c.l.b16 %v695
    %v730 = vunpack.c.l.b16 %v696
    %v731 = vunpack.c.l.b16 %v697
    %v732 = vunpack.c.l.b16 %v698
    %v733 = vunpack.c.l.b16 %v699
    %v734 = vpack.c.b16 %v719, %v718
    %v735 = vpack.c.b16 %v721, %v720
    %v736 = vpack.c.b16 %v723, %v722
    %v737 = vpack.c.b16 %v725, %v724
    %v738 = vpack.c.b16 %v727, %v726
    %v739 = vpack.c.b16 %v729, %v728
    %v740 = vpack.c.b16 %v731, %v730
    %v741 = vpack.c.b16 %v733, %v732
    %750 = vmatprep.subr.bf16.mxu0 0
    %751 = vmatpush1.bf16.msra.mxu0 %v734
    %752 = vmatprep.subr.bf16.mxu0 0
    %753 = vmatpush1.bf16.msra.mxu0 %v735
    %754 = vmatprep.subr.bf16.mxu0 0
    %755 = vmatpush1.bf16.msra.mxu0 %v736
    %756 = vmatprep.subr.bf16.mxu0 0
    %757 = vmatpush1.bf16.msra.mxu0 %v737
    %758 = vmatprep.subr.bf16.mxu0 0
    %759 = vmatpush1.bf16.msra.mxu0 %v738
    %760 = vmatprep.subr.bf16.mxu0 0
    %761 = vmatpush1.bf16.msra.mxu0 %v739
    %762 = vmatprep.subr.bf16.mxu0 0
    %763 = vmatpush1.bf16.msra.mxu0 %v740
    %764 = vmatprep.subr.bf16.mxu0 0
    %765 = vmatpush1.bf16.msra.mxu0 %v741
    %766 = vmatprep.subr.bf16.mxu0 0
    %767 = vmatpush1.bf16.msra.mxu0 0
    %768 = vmatprep.subr.bf16.mxu0 0
    %769 = vmatpush1.bf16.msra.mxu0 0
    %770 = vmatprep.subr.bf16.mxu0 0
    %771 = vmatpush1.bf16.msra.mxu0 0
    %772 = vmatprep.subr.bf16.mxu0 0
    %773 = vmatpush1.bf16.msra.mxu0 0
    %774 = vmatprep.subr.bf16.mxu0 0
    %775 = vmatpush1.bf16.msra.mxu0 0
    %776 = vmatprep.subr.bf16.mxu0 0
    %777 = vmatpush1.bf16.msra.mxu0 0
    %778 = vmatprep.subr.bf16.mxu0 0
    %779 = vmatpush1.bf16.msra.mxu0 0
    %780 = vmatprep.subr.bf16.mxu0 0
    %781 = vmatpush1.bf16.msra.mxu0 0
    %782 = vmatprep.mubr.bf16.mxu0 0
    %783 = vmatmul.mubr.bf16.gmra.mrb[0].mxu0 %v675
    %v784 = vpop.f32.mrb[0].mxu0
    %v785 = vadd.f32 0.0, %v784
    %v786 = vpop.f32.mrb[0].mxu0
    %v787 = vpop.f32.mrb[0].mxu0
    %v788 = vadd.f32 0.0, %v787
    %v789 = vpop.f32.mrb[0].mxu0
    %790 = vmatprep.mubr.bf16.mxu0 0
    %791 = vmatmul.mubr.bf16.gmra.mrb[0].mxu0 %v676
    %v792 = vpop.f32.mrb[0].mxu0
    %v793 = vadd.f32 0.0, %v792
    %v794 = vpop.f32.mrb[0].mxu0
    %v795 = vpop.f32.mrb[0].mxu0
    %v796 = vadd.f32 0.0, %v795
    %v797 = vpop.f32.mrb[0].mxu0
    %798 = vdwg.mxu0
    %799 = vmatprep.subr.bf16.mxu0 0
    %800 = vmatpush1.bf16.msra.mxu0 %v734
    %801 = vmatprep.subr.bf16.mxu0 0
    %802 = vmatpush1.bf16.msra.mxu0 %v735
    %803 = vmatprep.subr.bf16.mxu0 0
    %804 = vmatpush1.bf16.msra.mxu0 %v736
    %805 = vmatprep.subr.bf16.mxu0 0
    %806 = vmatpush1.bf16.msra.mxu0 %v737
    %807 = vmatprep.subr.bf16.mxu0 0
    %808 = vmatpush1.bf16.msra.mxu0 %v738
    %809 = vmatprep.subr.bf16.mxu0 0
    %810 = vmatpush1.bf16.msra.mxu0 %v739
    %811 = vmatprep.subr.bf16.mxu0 0
    %812 = vmatpush1.bf16.msra.mxu0 %v740
    %813 = vmatprep.subr.bf16.mxu0 0
    %814 = vmatpush1.bf16.msra.mxu0 %v741
    %815 = vmatprep.subr.bf16.mxu0 0
    %816 = vmatpush1.bf16.msra.mxu0 0
    %817 = vmatprep.subr.bf16.mxu0 0
    %818 = vmatpush1.bf16.msra.mxu0 0
    %819 = vmatprep.subr.bf16.mxu0 0
    %820 = vmatpush1.bf16.msra.mxu0 0
    %821 = vmatprep.subr.bf16.mxu0 0
    %822 = vmatpush1.bf16.msra.mxu0 0
    %823 = vmatprep.subr.bf16.mxu0 0
    %824 = vmatpush1.bf16.msra.mxu0 0
    %825 = vmatprep.subr.bf16.mxu0 0
    %826 = vmatpush1.bf16.msra.mxu0 0
    %827 = vmatprep.subr.bf16.mxu0 0
    %828 = vmatpush1.bf16.msra.mxu0 0
    %829 = vmatprep.subr.bf16.mxu0 0
    %830 = vmatpush1.bf16.msra.mxu0 0
    %831 = vmatprep.mubr.bf16.mxu0 0
    %832 = vmatmul.mubr.bf16.gmra.mrb[0].mxu0 %v681
    %v833 = vpop.f32.mrb[0].mxu0
    %v834 = vadd.f32 0.0, %v833
    %v835 = vpop.f32.mrb[0].mxu0
    %v836 = vpop.f32.mrb[0].mxu0
    %v837 = vadd.f32 0.0, %v836
    %v838 = vpop.f32.mrb[0].mxu0
    %839 = vmatprep.mubr.bf16.mxu0 0
    %840 = vmatmul.mubr.bf16.gmra.mrb[0].mxu0 %v682
    %v841 = vpop.f32.mrb[0].mxu0
    %v842 = vadd.f32 0.0, %v841
    %v843 = vpop.f32.mrb[0].mxu0
    %v844 = vpop.f32.mrb[0].mxu0
    %v845 = vadd.f32 0.0, %v844
    %v846 = vpop.f32.mrb[0].mxu0
    %847 = vdwg.mxu0
    %v848 = vpack.c.bf16 %v788, %v785
    %v849 = vpack.c.bf16 %v796, %v793
    %v850 = vpack.c.bf16 %v701, %v701
    %v852 = vpack.i.b16 %v850, %v850
    %v854 = vlaneseq
    %v855 = vshrl.u32 %v854, 7
    %v856 = vsub.s32 0, %v855
    %v857 = vrot.slane %v852, %v856
    %v858 = vadd.bf16 %v848, %v857
    %v859 = vadd.bf16 %v849, %v857
    %v860 = vtanh.bf16.pop %v858
    %v861 = vtanh.bf16.pop %v859
    %v862 = vpack.c.bf16 %v837, %v834
    %v863 = vpack.c.bf16 %v845, %v842
    %v864 = vadd.bf16 %v862, %v857
    %v865 = vadd.bf16 %v863, %v857
    %v866 = vtanh.bf16.pop %v864
    %v867 = vtanh.bf16.pop %v865
    %s868 = scalar_lea.vmem [#allocation5], 768
    %v869 = vld [vmem:[%s868] sm:$0xf]
    %v870 = vld [vmem:[%s868 + $0x8] sm:$0xf]
    %v871 = vld [vmem:[%s868 + $0x10] sm:$0xf]
    %v872 = vld [vmem:[%s868 + $0x18] sm:$0xf]
    %v873 = vld [vmem:[%s868 + $0x20] sm:$0xf]
    %v874 = vld [vmem:[%s868 + $0x28] sm:$0xf]
    %v875 = vld [vmem:[%s868 + $0x30] sm:$0xf]
    %v876 = vld [vmem:[%s868 + $0x38] sm:$0xf]
    %v877 = vld [vmem:[%s868 + $0x40] sm:$0xf]
    %v878 = vld [vmem:[%s868 + $0x48] sm:$0xf]
    %v879 = vld [vmem:[%s868 + $0x50] sm:$0xf]
    %v880 = vld [vmem:[%s868 + $0x58] sm:$0xf]
    %v881 = vld [vmem:[%s868 + $0x60] sm:$0xf]
    %v882 = vld [vmem:[%s868 + $0x68] sm:$0xf]
    %v883 = vld [vmem:[%s868 + $0x70] sm:$0xf]
    %v884 = vld [vmem:[%s868 + $0x78] sm:$0xf]
    %s885 = scalar_lea.vmem [#allocation7], 6
    %v886 = vld [vmem:[%s885] sm:$0x1]
    %v903 = vunpack.c.l.b16 %v869
    %v904 = vunpack.c.l.b16 %v870
    %v905 = vunpack.c.l.b16 %v871
    %v906 = vunpack.c.l.b16 %v872
    %v907 = vunpack.c.l.b16 %v873
    %v908 = vunpack.c.l.b16 %v874
    %v909 = vunpack.c.l.b16 %v875
    %v910 = vunpack.c.l.b16 %v876
    %v911 = vunpack.c.l.b16 %v877
    %v912 = vunpack.c.l.b16 %v878
    %v913 = vunpack.c.l.b16 %v879
    %v914 = vunpack.c.l.b16 %v880
    %v915 = vunpack.c.l.b16 %v881
    %v916 = vunpack.c.l.b16 %v882
    %v917 = vunpack.c.l.b16 %v883
    %v918 = vunpack.c.l.b16 %v884
    %v919 = vpack.c.b16 %v904, %v903
    %v920 = vpack.c.b16 %v906, %v905
    %v921 = vpack.c.b16 %v908, %v907
    %v922 = vpack.c.b16 %v910, %v909
    %v923 = vpack.c.b16 %v912, %v911
    %v924 = vpack.c.b16 %v914, %v913
    %v925 = vpack.c.b16 %v916, %v915
    %v926 = vpack.c.b16 %v918, %v917
    %935 = vmatprep.subr.bf16.mxu0 0
    %936 = vmatpush1.bf16.msra.mxu0 %v919
    %937 = vmatprep.subr.bf16.mxu0 0
    %938 = vmatpush1.bf16.msra.mxu0 %v920
    %939 = vmatprep.subr.bf16.mxu0 0
    %940 = vmatpush1.bf16.msra.mxu0 %v921
    %941 = vmatprep.subr.bf16.mxu0 0
    %942 = vmatpush1.bf16.msra.mxu0 %v922
    %943 = vmatprep.subr.bf16.mxu0 0
    %944 = vmatpush1.bf16.msra.mxu0 %v923
    %945 = vmatprep.subr.bf16.mxu0 0
    %946 = vmatpush1.bf16.msra.mxu0 %v924
    %947 = vmatprep.subr.bf16.mxu0 0
    %948 = vmatpush1.bf16.msra.mxu0 %v925
    %949 = vmatprep.subr.bf16.mxu0 0
    %950 = vmatpush1.bf16.msra.mxu0 %v926
    %951 = vmatprep.subr.bf16.mxu0 0
    %952 = vmatpush1.bf16.msra.mxu0 0
    %953 = vmatprep.subr.bf16.mxu0 0
    %954 = vmatpush1.bf16.msra.mxu0 0
    %955 = vmatprep.subr.bf16.mxu0 0
    %956 = vmatpush1.bf16.msra.mxu0 0
    %957 = vmatprep.subr.bf16.mxu0 0
    %958 = vmatpush1.bf16.msra.mxu0 0
    %959 = vmatprep.subr.bf16.mxu0 0
    %960 = vmatpush1.bf16.msra.mxu0 0
    %961 = vmatprep.subr.bf16.mxu0 0
    %962 = vmatpush1.bf16.msra.mxu0 0
    %963 = vmatprep.subr.bf16.mxu0 0
    %964 = vmatpush1.bf16.msra.mxu0 0
    %965 = vmatprep.subr.bf16.mxu0 0
    %966 = vmatpush1.bf16.msra.mxu0 0
    %967 = vmatprep.mubr.bf16.mxu0 0
    %968 = vmatmul.mubr.bf16.gmra.mrb[0].mxu0 %v860
    %v969 = vpop.f32.mrb[0].mxu0
    %v970 = vadd.f32 0.0, %v969
    %v971 = vpop.f32.mrb[0].mxu0
    %v972 = vpop.f32.mrb[0].mxu0
    %v973 = vadd.f32 0.0, %v972
    %v974 = vpop.f32.mrb[0].mxu0
    %975 = vmatprep.mubr.bf16.mxu0 0
    %976 = vmatmul.mubr.bf16.gmra.mrb[0].mxu0 %v861
    %v977 = vpop.f32.mrb[0].mxu0
    %v978 = vadd.f32 0.0, %v977
    %v979 = vpop.f32.mrb[0].mxu0
    %v980 = vpop.f32.mrb[0].mxu0
    %v981 = vadd.f32 0.0, %v980
    %v982 = vpop.f32.mrb[0].mxu0
    %983 = vdwg.mxu0
    %984 = vmatprep.subr.bf16.mxu0 0
    %985 = vmatpush1.bf16.msra.mxu0 %v919
    %986 = vmatprep.subr.bf16.mxu0 0
    %987 = vmatpush1.bf16.msra.mxu0 %v920
    %988 = vmatprep.subr.bf16.mxu0 0
    %989 = vmatpush1.bf16.msra.mxu0 %v921
    %990 = vmatprep.subr.bf16.mxu0 0
    %991 = vmatpush1.bf16.msra.mxu0 %v922
    %992 = vmatprep.subr.bf16.mxu0 0
    %993 = vmatpush1.bf16.msra.mxu0 %v923
    %994 = vmatprep.subr.bf16.mxu0 0
    %995 = vmatpush1.bf16.msra.mxu0 %v924
    %996 = vmatprep.subr.bf16.mxu0 0
    %997 = vmatpush1.bf16.msra.mxu0 %v925
    %998 = vmatprep.subr.bf16.mxu0 0
    %999 = vmatpush1.bf16.msra.mxu0 %v926
    %1000 = vmatprep.subr.bf16.mxu0 0
    %1001 = vmatpush1.bf16.msra.mxu0 0
    %1002 = vmatprep.subr.bf16.mxu0 0
    %1003 = vmatpush1.bf16.msra.mxu0 0
    %1004 = vmatprep.subr.bf16.mxu0 0
    %1005 = vmatpush1.bf16.msra.mxu0 0
    %1006 = vmatprep.subr.bf16.mxu0 0
    %1007 = vmatpush1.bf16.msra.mxu0 0
    %1008 = vmatprep.subr.bf16.mxu0 0
    %1009 = vmatpush1.bf16.msra.mxu0 0
    %1010 = vmatprep.subr.bf16.mxu0 0
    %1011 = vmatpush1.bf16.msra.mxu0 0
    %1012 = vmatprep.subr.bf16.mxu0 0
    %1013 = vmatpush1.bf16.msra.mxu0 0
    %1014 = vmatprep.subr.bf16.mxu0 0
    %1015 = vmatpush1.bf16.msra.mxu0 0
    %1016 = vmatprep.mubr.bf16.mxu0 0
    %1017 = vmatmul.mubr.bf16.gmra.mrb[0].mxu0 %v866
    %v1018 = vpop.f32.mrb[0].mxu0
    %v1019 = vadd.f32 0.0, %v1018
    %v1020 = vpop.f32.mrb[0].mxu0
    %v1021 = vpop.f32.mrb[0].mxu0
    %v1022 = vadd.f32 0.0, %v1021
    %v1023 = vpop.f32.mrb[0].mxu0
    %1024 = vmatprep.mubr.bf16.mxu0 0
    %1025 = vmatmul.mubr.bf16.gmra.mrb[0].mxu0 %v867
    %v1026 = vpop.f32.mrb[0].mxu0
    %v1027 = vadd.f32 0.0, %v1026
    %v1028 = vpop.f32.mrb[0].mxu0
    %v1029 = vpop.f32.mrb[0].mxu0
    %v1030 = vadd.f32 0.0, %v1029
    %v1031 = vpop.f32.mrb[0].mxu0
    %1032 = vdwg.mxu0
    %v1033 = vpack.c.bf16 %v973, %v970
    %v1034 = vpack.c.bf16 %v981, %v978
    %v1035 = vpack.c.bf16 %v886, %v886
    %v1037 = vpack.i.b16 %v1035, %v1035
    %v1039 = vlaneseq
    %v1040 = vshrl.u32 %v1039, 7
    %v1041 = vsub.s32 0, %v1040
    %v1042 = vrot.slane %v1037, %v1041
    %v1043 = vadd.bf16 %v1033, %v1042
    %v1044 = vadd.bf16 %v1034, %v1042
    %v1045 = vtanh.bf16.pop %v1043
    %v1046 = vtanh.bf16.pop %v1044
    %v1047 = vpack.c.bf16 %v1022, %v1019
    %v1048 = vpack.c.bf16 %v1030, %v1027
    %v1049 = vadd.bf16 %v1047, %v1042
    %v1050 = vadd.bf16 %v1048, %v1042
    %v1051 = vtanh.bf16.pop %v1049
    %v1052 = vtanh.bf16.pop %v1050
    %s1053 = scalar_lea.vmem [#allocation5], 1024
    %v1054 = vld [vmem:[%s1053] sm:$0xf]
    %v1055 = vld [vmem:[%s1053 + $0x8] sm:$0xf]
    %v1056 = vld [vmem:[%s1053 + $0x10] sm:$0xf]
    %v1057 = vld [vmem:[%s1053 + $0x18] sm:$0xf]
    %v1058 = vld [vmem:[%s1053 + $0x20] sm:$0xf]
    %v1059 = vld [vmem:[%s1053 + $0x28] sm:$0xf]
    %v1060 = vld [vmem:[%s1053 + $0x30] sm:$0xf]
    %v1061 = vld [vmem:[%s1053 + $0x38] sm:$0xf]
    %v1062 = vld [vmem:[%s1053 + $0x40] sm:$0xf]
    %v1063 = vld [vmem:[%s1053 + $0x48] sm:$0xf]
    %v1064 = vld [vmem:[%s1053 + $0x50] sm:$0xf]
    %v1065 = vld [vmem:[%s1053 + $0x58] sm:$0xf]
    %v1066 = vld [vmem:[%s1053 + $0x60] sm:$0xf]
    %v1067 = vld [vmem:[%s1053 + $0x68] sm:$0xf]
    %v1068 = vld [vmem:[%s1053 + $0x70] sm:$0xf]
    %v1069 = vld [vmem:[%s1053 + $0x78] sm:$0xf]
    %s1070 = scalar_lea.vmem [#allocation7], 8
    %v1071 = vld [vmem:[%s1070] sm:$0x1]
    %v1073 = vlaneseq
    %v1074 = vshrl.u32 %v1073, 7
    %v1075 = vsub.s32 0, %v1074
    %v1076 = vrot.slane %v1071, %v1075
    %v1094 = vunpack.c.l.b16 %v1054
    %v1095 = vunpack.c.l.b16 %v1055
    %v1096 = vunpack.c.l.b16 %v1056
    %v1097 = vunpack.c.l.b16 %v1057
    %v1098 = vunpack.c.l.b16 %v1058
    %v1099 = vunpack.c.l.b16 %v1059
    %v1100 = vunpack.c.l.b16 %v1060
    %v1101 = vunpack.c.l.b16 %v1061
    %v1102 = vunpack.c.l.b16 %v1062
    %v1103 = vunpack.c.l.b16 %v1063
    %v1104 = vunpack.c.l.b16 %v1064
    %v1105 = vunpack.c.l.b16 %v1065
    %v1106 = vunpack.c.l.b16 %v1066
    %v1107 = vunpack.c.l.b16 %v1067
    %v1108 = vunpack.c.l.b16 %v1068
    %v1109 = vunpack.c.l.b16 %v1069
    %v1110 = vpack.c.b16 %v1095, %v1094
    %v1111 = vpack.c.b16 %v1097, %v1096
    %v1112 = vpack.c.b16 %v1099, %v1098
    %v1113 = vpack.c.b16 %v1101, %v1100
    %v1114 = vpack.c.b16 %v1103, %v1102
    %v1115 = vpack.c.b16 %v1105, %v1104
    %v1116 = vpack.c.b16 %v1107, %v1106
    %v1117 = vpack.c.b16 %v1109, %v1108
    %1126 = vmatprep.subr.bf16.mxu0 0
    %1127 = vmatpush1.bf16.msra.mxu0 %v1110
    %1128 = vmatprep.subr.bf16.mxu0 0
    %1129 = vmatpush1.bf16.msra.mxu0 %v1111
    %1130 = vmatprep.subr.bf16.mxu0 0
    %1131 = vmatpush1.bf16.msra.mxu0 %v1112
    %1132 = vmatprep.subr.bf16.mxu0 0
    %1133 = vmatpush1.bf16.msra.mxu0 %v1113
    %1134 = vmatprep.subr.bf16.mxu0 0
    %1135 = vmatpush1.bf16.msra.mxu0 %v1114
    %1136 = vmatprep.subr.bf16.mxu0 0
    %1137 = vmatpush1.bf16.msra.mxu0 %v1115
    %1138 = vmatprep.subr.bf16.mxu0 0
    %1139 = vmatpush1.bf16.msra.mxu0 %v1116
    %1140 = vmatprep.subr.bf16.mxu0 0
    %1141 = vmatpush1.bf16.msra.mxu0 %v1117
    %1142 = vmatprep.subr.bf16.mxu0 0
    %1143 = vmatpush1.bf16.msra.mxu0 0
    %1144 = vmatprep.subr.bf16.mxu0 0
    %1145 = vmatpush1.bf16.msra.mxu0 0
    %1146 = vmatprep.subr.bf16.mxu0 0
    %1147 = vmatpush1.bf16.msra.mxu0 0
    %1148 = vmatprep.subr.bf16.mxu0 0
    %1149 = vmatpush1.bf16.msra.mxu0 0
    %1150 = vmatprep.subr.bf16.mxu0 0
    %1151 = vmatpush1.bf16.msra.mxu0 0
    %1152 = vmatprep.subr.bf16.mxu0 0
    %1153 = vmatpush1.bf16.msra.mxu0 0
    %1154 = vmatprep.subr.bf16.mxu0 0
    %1155 = vmatpush1.bf16.msra.mxu0 0
    %1156 = vmatprep.subr.bf16.mxu0 0
    %1157 = vmatpush1.bf16.msra.mxu0 0
    %1158 = vmatprep.mubr.bf16.mxu0 0
    %1159 = vmatmul.mubr.bf16.gmra.mrb[0].mxu0 %v1045
    %v1160 = vpop.f32.mrb[0].mxu0
    %v1161 = vadd.f32 %v1076, %v1160
    %v1162 = vpop.f32.mrb[0].mxu0
    %v1163 = vpop.f32.mrb[0].mxu0
    %v1164 = vadd.f32 %v1076, %v1163
    %v1165 = vpop.f32.mrb[0].mxu0
    %1166 = vmatprep.mubr.bf16.mxu0 0
    %1167 = vmatmul.mubr.bf16.gmra.mrb[0].mxu0 %v1046
    %v1168 = vpop.f32.mrb[0].mxu0
    %v1169 = vadd.f32 %v1076, %v1168
    %v1170 = vpop.f32.mrb[0].mxu0
    %v1171 = vpop.f32.mrb[0].mxu0
    %v1172 = vadd.f32 %v1076, %v1171
    %v1173 = vpop.f32.mrb[0].mxu0
    %1174 = vdwg.mxu0
    %1175 = vst [vmem:[#allocation8] sm:$0xff] %v1161
    %1176 = vst [vmem:[#allocation8 + $0x8] sm:$0xff] %v1164
    %1177 = vst [vmem:[#allocation8 + $0x10] sm:$0xff] %v1169
    %1178 = vst [vmem:[#allocation8 + $0x18] sm:$0xff] %v1172
    %v1179 = vpack.c.bf16 %v1164, %v1161
    %v1180 = vpack.c.bf16 %v1172, %v1169
    %1181 = vmatprep.subr.bf16.mxu0 0
    %1182 = vmatpush1.bf16.msra.mxu0 %v1110
    %1183 = vmatprep.subr.bf16.mxu0 0
    %1184 = vmatpush1.bf16.msra.mxu0 %v1111
    %1185 = vmatprep.subr.bf16.mxu0 0
    %1186 = vmatpush1.bf16.msra.mxu0 %v1112
    %1187 = vmatprep.subr.bf16.mxu0 0
    %1188 = vmatpush1.bf16.msra.mxu0 %v1113
    %1189 = vmatprep.subr.bf16.mxu0 0
    %1190 = vmatpush1.bf16.msra.mxu0 %v1114
    %1191 = vmatprep.subr.bf16.mxu0 0
    %1192 = vmatpush1.bf16.msra.mxu0 %v1115
    %1193 = vmatprep.subr.bf16.mxu0 0
    %1194 = vmatpush1.bf16.msra.mxu0 %v1116
    %1195 = vmatprep.subr.bf16.mxu0 0
    %1196 = vmatpush1.bf16.msra.mxu0 %v1117
    %1197 = vmatprep.subr.bf16.mxu0 0
    %1198 = vmatpush1.bf16.msra.mxu0 0
    %1199 = vmatprep.subr.bf16.mxu0 0
    %1200 = vmatpush1.bf16.msra.mxu0 0
    %1201 = vmatprep.subr.bf16.mxu0 0
    %1202 = vmatpush1.bf16.msra.mxu0 0
    %1203 = vmatprep.subr.bf16.mxu0 0
    %1204 = vmatpush1.bf16.msra.mxu0 0
    %1205 = vmatprep.subr.bf16.mxu0 0
    %1206 = vmatpush1.bf16.msra.mxu0 0
    %1207 = vmatprep.subr.bf16.mxu0 0
    %1208 = vmatpush1.bf16.msra.mxu0 0
    %1209 = vmatprep.subr.bf16.mxu0 0
    %1210 = vmatpush1.bf16.msra.mxu0 0
    %1211 = vmatprep.subr.bf16.mxu0 0
    %1212 = vmatpush1.bf16.msra.mxu0 0
    %1213 = vmatprep.mubr.bf16.mxu0 0
    %1214 = vmatmul.mubr.bf16.gmra.mrb[0].mxu0 %v1051
    %v1215 = vpop.f32.mrb[0].mxu0
    %v1216 = vadd.f32 %v1076, %v1215
    %v1217 = vpop.f32.mrb[0].mxu0
    %v1218 = vpop.f32.mrb[0].mxu0
    %v1219 = vadd.f32 %v1076, %v1218
    %v1220 = vpop.f32.mrb[0].mxu0
    %1221 = vmatprep.mubr.bf16.mxu0 0
    %1222 = vmatmul.mubr.bf16.gmra.mrb[0].mxu0 %v1052
    %v1223 = vpop.f32.mrb[0].mxu0
    %v1224 = vadd.f32 %v1076, %v1223
    %v1225 = vpop.f32.mrb[0].mxu0
    %v1226 = vpop.f32.mrb[0].mxu0
    %v1227 = vadd.f32 %v1076, %v1226
    %v1228 = vpop.f32.mrb[0].mxu0
    %1229 = vdwg.mxu0
    %1230 = vst [vmem:[#allocation8 + $0x20] sm:$0xff] %v1216
    %1231 = vst [vmem:[#allocation8 + $0x28] sm:$0xff] %v1219
    %1232 = vst [vmem:[#allocation8 + $0x30] sm:$0xff] %v1224
    %1233 = vst [vmem:[#allocation8 + $0x38] sm:$0xff] %v1227
    %v1234 = vpack.c.bf16 %v1219, %v1216
    %v1235 = vpack.c.bf16 %v1227, %v1224
    %s1236 = scalar_lea.vmem [#allocation5], 1280
    %v1237 = vld [vmem:[%s1236] sm:$0xf]
    %v1238 = vld [vmem:[%s1236 + $0x8] sm:$0xf]
    %v1239 = vld [vmem:[%s1236 + $0x10] sm:$0xf]
    %v1240 = vld [vmem:[%s1236 + $0x18] sm:$0xf]
    %v1241 = vld [vmem:[%s1236 + $0x20] sm:$0xf]
    %v1242 = vld [vmem:[%s1236 + $0x28] sm:$0xf]
    %v1243 = vld [vmem:[%s1236 + $0x30] sm:$0xf]
    %v1244 = vld [vmem:[%s1236 + $0x38] sm:$0xf]
    %v1245 = vld [vmem:[%s1236 + $0x40] sm:$0xf]
    %v1246 = vld [vmem:[%s1236 + $0x48] sm:$0xf]
    %v1247 = vld [vmem:[%s1236 + $0x50] sm:$0xf]
    %v1248 = vld [vmem:[%s1236 + $0x58] sm:$0xf]
    %v1249 = vld [vmem:[%s1236 + $0x60] sm:$0xf]
    %v1250 = vld [vmem:[%s1236 + $0x68] sm:$0xf]
    %v1251 = vld [vmem:[%s1236 + $0x70] sm:$0xf]
    %v1252 = vld [vmem:[%s1236 + $0x78] sm:$0xf]
    %s1253 = scalar_lea.vmem [#allocation7], 10
    %v1254 = vld [vmem:[%s1253] sm:$0x1]
    %v1271 = vunpack.c.l.b16 %v1237
    %v1272 = vunpack.c.l.b16 %v1238
    %v1273 = vunpack.c.l.b16 %v1239
    %v1274 = vunpack.c.l.b16 %v1240
    %v1275 = vunpack.c.l.b16 %v1241
    %v1276 = vunpack.c.l.b16 %v1242
    %v1277 = vunpack.c.l.b16 %v1243
    %v1278 = vunpack.c.l.b16 %v1244
    %v1279 = vunpack.c.l.b16 %v1245
    %v1280 = vunpack.c.l.b16 %v1246
    %v1281 = vunpack.c.l.b16 %v1247
    %v1282 = vunpack.c.l.b16 %v1248
    %v1283 = vunpack.c.l.b16 %v1249
    %v1284 = vunpack.c.l.b16 %v1250
    %v1285 = vunpack.c.l.b16 %v1251
    %v1286 = vunpack.c.l.b16 %v1252
    %v1287 = vpack.c.b16 %v1272, %v1271
    %v1288 = vpack.c.b16 %v1274, %v1273
    %v1289 = vpack.c.b16 %v1276, %v1275
    %v1290 = vpack.c.b16 %v1278, %v1277
    %v1291 = vpack.c.b16 %v1280, %v1279
    %v1292 = vpack.c.b16 %v1282, %v1281
    %v1293 = vpack.c.b16 %v1284, %v1283
    %v1294 = vpack.c.b16 %v1286, %v1285
    %1303 = vmatprep.subr.bf16.mxu0 0
    %1304 = vmatpush1.bf16.msra.mxu0 %v1287
    %1305 = vmatprep.subr.bf16.mxu0 0
    %1306 = vmatpush1.bf16.msra.mxu0 %v1288
    %1307 = vmatprep.subr.bf16.mxu0 0
    %1308 = vmatpush1.bf16.msra.mxu0 %v1289
    %1309 = vmatprep.subr.bf16.mxu0 0
    %1310 = vmatpush1.bf16.msra.mxu0 %v1290
    %1311 = vmatprep.subr.bf16.mxu0 0
    %1312 = vmatpush1.bf16.msra.mxu0 %v1291
    %1313 = vmatprep.subr.bf16.mxu0 0
    %1314 = vmatpush1.bf16.msra.mxu0 %v1292
    %1315 = vmatprep.subr.bf16.mxu0 0
    %1316 = vmatpush1.bf16.msra.mxu0 %v1293
    %1317 = vmatprep.subr.bf16.mxu0 0
    %1318 = vmatpush1.bf16.msra.mxu0 %v1294
    %1319 = vmatprep.subr.bf16.mxu0 0
    %1320 = vmatpush1.bf16.msra.mxu0 0
    %1321 = vmatprep.subr.bf16.mxu0 0
    %1322 = vmatpush1.bf16.msra.mxu0 0
    %1323 = vmatprep.subr.bf16.mxu0 0
    %1324 = vmatpush1.bf16.msra.mxu0 0
    %1325 = vmatprep.subr.bf16.mxu0 0
    %1326 = vmatpush1.bf16.msra.mxu0 0
    %1327 = vmatprep.subr.bf16.mxu0 0
    %1328 = vmatpush1.bf16.msra.mxu0 0
    %1329 = vmatprep.subr.bf16.mxu0 0
    %1330 = vmatpush1.bf16.msra.mxu0 0
    %1331 = vmatprep.subr.bf16.mxu0 0
    %1332 = vmatpush1.bf16.msra.mxu0 0
    %1333 = vmatprep.subr.bf16.mxu0 0
    %1334 = vmatpush1.bf16.msra.mxu0 0
    %1335 = vmatprep.mubr.bf16.mxu0 0
    %1336 = vmatmul.mubr.bf16.gmra.mrb[0].mxu0 %v1179
    %v1337 = vpop.f32.mrb[0].mxu0
    %v1338 = vadd.f32 0.0, %v1337
    %v1339 = vpop.f32.mrb[0].mxu0
    %v1340 = vpop.f32.mrb[0].mxu0
    %v1341 = vadd.f32 0.0, %v1340
    %v1342 = vpop.f32.mrb[0].mxu0
    %1343 = vmatprep.mubr.bf16.mxu0 0
    %1344 = vmatmul.mubr.bf16.gmra.mrb[0].mxu0 %v1180
    %v1345 = vpop.f32.mrb[0].mxu0
    %v1346 = vadd.f32 0.0, %v1345
    %v1347 = vpop.f32.mrb[0].mxu0
    %v1348 = vpop.f32.mrb[0].mxu0
    %v1349 = vadd.f32 0.0, %v1348
    %v1350 = vpop.f32.mrb[0].mxu0
    %1351 = vdwg.mxu0
    %1352 = vmatprep.subr.bf16.mxu0 0
    %1353 = vmatpush1.bf16.msra.mxu0 %v1287
    %1354 = vmatprep.subr.bf16.mxu0 0
    %1355 = vmatpush1.bf16.msra.mxu0 %v1288
    %1356 = vmatprep.subr.bf16.mxu0 0
    %1357 = vmatpush1.bf16.msra.mxu0 %v1289
    %1358 = vmatprep.subr.bf16.mxu0 0
    %1359 = vmatpush1.bf16.msra.mxu0 %v1290
    %1360 = vmatprep.subr.bf16.mxu0 0
    %1361 = vmatpush1.bf16.msra.mxu0 %v1291
    %1362 = vmatprep.subr.bf16.mxu0 0
    %1363 = vmatpush1.bf16.msra.mxu0 %v1292
    %1364 = vmatprep.subr.bf16.mxu0 0
    %1365 = vmatpush1.bf16.msra.mxu0 %v1293
    %1366 = vmatprep.subr.bf16.mxu0 0
    %1367 = vmatpush1.bf16.msra.mxu0 %v1294
    %1368 = vmatprep.subr.bf16.mxu0 0
    %1369 = vmatpush1.bf16.msra.mxu0 0
    %1370 = vmatprep.subr.bf16.mxu0 0
    %1371 = vmatpush1.bf16.msra.mxu0 0
    %1372 = vmatprep.subr.bf16.mxu0 0
    %1373 = vmatpush1.bf16.msra.mxu0 0
    %1374 = vmatprep.subr.bf16.mxu0 0
    %1375 = vmatpush1.bf16.msra.mxu0 0
    %1376 = vmatprep.subr.bf16.mxu0 0
    %1377 = vmatpush1.bf16.msra.mxu0 0
    %1378 = vmatprep.subr.bf16.mxu0 0
    %1379 = vmatpush1.bf16.msra.mxu0 0
    %1380 = vmatprep.subr.bf16.mxu0 0
    %1381 = vmatpush1.bf16.msra.mxu0 0
    %1382 = vmatprep.subr.bf16.mxu0 0
    %1383 = vmatpush1.bf16.msra.mxu0 0
    %1384 = vmatprep.mubr.bf16.mxu0 0
    %1385 = vmatmul.mubr.bf16.gmra.mrb[0].mxu0 %v1234
    %v1386 = vpop.f32.mrb[0].mxu0
    %v1387 = vadd.f32 0.0, %v1386
    %v1388 = vpop.f32.mrb[0].mxu0
    %v1389 = vpop.f32.mrb[0].mxu0
    %v1390 = vadd.f32 0.0, %v1389
    %v1391 = vpop.f32.mrb[0].mxu0
    %1392 = vmatprep.mubr.bf16.mxu0 0
    %1393 = vmatmul.mubr.bf16.gmra.mrb[0].mxu0 %v1235
    %v1394 = vpop.f32.mrb[0].mxu0
    %v1395 = vadd.f32 0.0, %v1394
    %v1396 = vpop.f32.mrb[0].mxu0
    %v1397 = vpop.f32.mrb[0].mxu0
    %v1398 = vadd.f32 0.0, %v1397
    %v1399 = vpop.f32.mrb[0].mxu0
    %1400 = vdwg.mxu0
    %v1401 = vpack.c.bf16 %v1341, %v1338
    %v1402 = vpack.c.bf16 %v1349, %v1346
    %v1403 = vpack.c.bf16 %v1254, %v1254
    %v1405 = vpack.i.b16 %v1403, %v1403
    %v1407 = vlaneseq
    %v1408 = vshrl.u32 %v1407, 7
    %v1409 = vsub.s32 0, %v1408
    %v1410 = vrot.slane %v1405, %v1409
    %v1411 = vadd.bf16 %v1401, %v1410
    %v1412 = vadd.bf16 %v1402, %v1410
    %v1413 = vtanh.bf16.pop %v1411
    %v1414 = vtanh.bf16.pop %v1412
    %v1415 = vpack.c.bf16 %v1390, %v1387
    %v1416 = vpack.c.bf16 %v1398, %v1395
    %v1417 = vadd.bf16 %v1415, %v1410
    %v1418 = vadd.bf16 %v1416, %v1410
    %v1419 = vtanh.bf16.pop %v1417
    %v1420 = vtanh.bf16.pop %v1418
    %s1421 = scalar_lea.vmem [#allocation5], 1536
    %v1422 = vld [vmem:[%s1421] sm:$0xf]
    %v1423 = vld [vmem:[%s1421 + $0x8] sm:$0xf]
    %v1424 = vld [vmem:[%s1421 + $0x10] sm:$0xf]
    %v1425 = vld [vmem:[%s1421 + $0x18] sm:$0xf]
    %v1426 = vld [vmem:[%s1421 + $0x20] sm:$0xf]
    %v1427 = vld [vmem:[%s1421 + $0x28] sm:$0xf]
    %v1428 = vld [vmem:[%s1421 + $0x30] sm:$0xf]
    %v1429 = vld [vmem:[%s1421 + $0x38] sm:$0xf]
    %v1430 = vld [vmem:[%s1421 + $0x40] sm:$0xf]
    %v1431 = vld [vmem:[%s1421 + $0x48] sm:$0xf]
    %v1432 = vld [vmem:[%s1421 + $0x50] sm:$0xf]
    %v1433 = vld [vmem:[%s1421 + $0x58] sm:$0xf]
    %v1434 = vld [vmem:[%s1421 + $0x60] sm:$0xf]
    %v1435 = vld [vmem:[%s1421 + $0x68] sm:$0xf]
    %v1436 = vld [vmem:[%s1421 + $0x70] sm:$0xf]
    %v1437 = vld [vmem:[%s1421 + $0x78] sm:$0xf]
    %s1438 = scalar_lea.vmem [#allocation7], 12
    %v1439 = vld [vmem:[%s1438] sm:$0x1]
    %v1456 = vunpack.c.l.b16 %v1422
    %v1457 = vunpack.c.l.b16 %v1423
    %v1458 = vunpack.c.l.b16 %v1424
    %v1459 = vunpack.c.l.b16 %v1425
    %v1460 = vunpack.c.l.b16 %v1426
    %v1461 = vunpack.c.l.b16 %v1427
    %v1462 = vunpack.c.l.b16 %v1428
    %v1463 = vunpack.c.l.b16 %v1429
    %v1464 = vunpack.c.l.b16 %v1430
    %v1465 = vunpack.c.l.b16 %v1431
    %v1466 = vunpack.c.l.b16 %v1432
    %v1467 = vunpack.c.l.b16 %v1433
    %v1468 = vunpack.c.l.b16 %v1434
    %v1469 = vunpack.c.l.b16 %v1435
    %v1470 = vunpack.c.l.b16 %v1436
    %v1471 = vunpack.c.l.b16 %v1437
    %v1472 = vpack.c.b16 %v1457, %v1456
    %v1473 = vpack.c.b16 %v1459, %v1458
    %v1474 = vpack.c.b16 %v1461, %v1460
    %v1475 = vpack.c.b16 %v1463, %v1462
    %v1476 = vpack.c.b16 %v1465, %v1464
    %v1477 = vpack.c.b16 %v1467, %v1466
    %v1478 = vpack.c.b16 %v1469, %v1468
    %v1479 = vpack.c.b16 %v1471, %v1470
    %1488 = vmatprep.subr.bf16.mxu0 0
    %1489 = vmatpush1.bf16.msra.mxu0 %v1472
    %1490 = vmatprep.subr.bf16.mxu0 0
    %1491 = vmatpush1.bf16.msra.mxu0 %v1473
    %1492 = vmatprep.subr.bf16.mxu0 0
    %1493 = vmatpush1.bf16.msra.mxu0 %v1474
    %1494 = vmatprep.subr.bf16.mxu0 0
    %1495 = vmatpush1.bf16.msra.mxu0 %v1475
    %1496 = vmatprep.subr.bf16.mxu0 0
    %1497 = vmatpush1.bf16.msra.mxu0 %v1476
    %1498 = vmatprep.subr.bf16.mxu0 0
    %1499 = vmatpush1.bf16.msra.mxu0 %v1477
    %1500 = vmatprep.subr.bf16.mxu0 0
    %1501 = vmatpush1.bf16.msra.mxu0 %v1478
    %1502 = vmatprep.subr.bf16.mxu0 0
    %1503 = vmatpush1.bf16.msra.mxu0 %v1479
    %1504 = vmatprep.subr.bf16.mxu0 0
    %1505 = vmatpush1.bf16.msra.mxu0 0
    %1506 = vmatprep.subr.bf16.mxu0 0
    %1507 = vmatpush1.bf16.msra.mxu0 0
    %1508 = vmatprep.subr.bf16.mxu0 0
    %1509 = vmatpush1.bf16.msra.mxu0 0
    %1510 = vmatprep.subr.bf16.mxu0 0
    %1511 = vmatpush1.bf16.msra.mxu0 0
    %1512 = vmatprep.subr.bf16.mxu0 0
    %1513 = vmatpush1.bf16.msra.mxu0 0
    %1514 = vmatprep.subr.bf16.mxu0 0
    %1515 = vmatpush1.bf16.msra.mxu0 0
    %1516 = vmatprep.subr.bf16.mxu0 0
    %1517 = vmatpush1.bf16.msra.mxu0 0
    %1518 = vmatprep.subr.bf16.mxu0 0
    %1519 = vmatpush1.bf16.msra.mxu0 0
    %1520 = vmatprep.mubr.bf16.mxu0 0
    %1521 = vmatmul.mubr.bf16.gmra.mrb[0].mxu0 %v1413
    %v1522 = vpop.f32.mrb[0].mxu0
    %v1523 = vadd.f32 0.0, %v1522
    %v1524 = vpop.f32.mrb[0].mxu0
    %v1525 = vpop.f32.mrb[0].mxu0
    %v1526 = vadd.f32 0.0, %v1525
    %v1527 = vpop.f32.mrb[0].mxu0
    %1528 = vmatprep.mubr.bf16.mxu0 0
    %1529 = vmatmul.mubr.bf16.gmra.mrb[0].mxu0 %v1414
    %v1530 = vpop.f32.mrb[0].mxu0
    %v1531 = vadd.f32 0.0, %v1530
    %v1532 = vpop.f32.mrb[0].mxu0
    %v1533 = vpop.f32.mrb[0].mxu0
    %v1534 = vadd.f32 0.0, %v1533
    %v1535 = vpop.f32.mrb[0].mxu0
    %1536 = vdwg.mxu0
    %1537 = vmatprep.subr.bf16.mxu0 0
    %1538 = vmatpush1.bf16.msra.mxu0 %v1472
    %1539 = vmatprep.subr.bf16.mxu0 0
    %1540 = vmatpush1.bf16.msra.mxu0 %v1473
    %1541 = vmatprep.subr.bf16.mxu0 0
    %1542 = vmatpush1.bf16.msra.mxu0 %v1474
    %1543 = vmatprep.subr.bf16.mxu0 0
    %1544 = vmatpush1.bf16.msra.mxu0 %v1475
    %1545 = vmatprep.subr.bf16.mxu0 0
    %1546 = vmatpush1.bf16.msra.mxu0 %v1476
    %1547 = vmatprep.subr.bf16.mxu0 0
    %1548 = vmatpush1.bf16.msra.mxu0 %v1477
    %1549 = vmatprep.subr.bf16.mxu0 0
    %1550 = vmatpush1.bf16.msra.mxu0 %v1478
    %1551 = vmatprep.subr.bf16.mxu0 0
    %1552 = vmatpush1.bf16.msra.mxu0 %v1479
    %1553 = vmatprep.subr.bf16.mxu0 0
    %1554 = vmatpush1.bf16.msra.mxu0 0
    %1555 = vmatprep.subr.bf16.mxu0 0
    %1556 = vmatpush1.bf16.msra.mxu0 0
    %1557 = vmatprep.subr.bf16.mxu0 0
    %1558 = vmatpush1.bf16.msra.mxu0 0
    %1559 = vmatprep.subr.bf16.mxu0 0
    %1560 = vmatpush1.bf16.msra.mxu0 0
    %1561 = vmatprep.subr.bf16.mxu0 0
    %1562 = vmatpush1.bf16.msra.mxu0 0
    %1563 = vmatprep.subr.bf16.mxu0 0
    %1564 = vmatpush1.bf16.msra.mxu0 0
    %1565 = vmatprep.subr.bf16.mxu0 0
    %1566 = vmatpush1.bf16.msra.mxu0 0
    %1567 = vmatprep.subr.bf16.mxu0 0
    %1568 = vmatpush1.bf16.msra.mxu0 0
    %1569 = vmatprep.mubr.bf16.mxu0 0
    %1570 = vmatmul.mubr.bf16.gmra.mrb[0].mxu0 %v1419
    %v1571 = vpop.f32.mrb[0].mxu0
    %v1572 = vadd.f32 0.0, %v1571
    %v1573 = vpop.f32.mrb[0].mxu0
    %v1574 = vpop.f32.mrb[0].mxu0
    %v1575 = vadd.f32 0.0, %v1574
    %v1576 = vpop.f32.mrb[0].mxu0
    %1577 = vmatprep.mubr.bf16.mxu0 0
    %1578 = vmatmul.mubr.bf16.gmra.mrb[0].mxu0 %v1420
    %v1579 = vpop.f32.mrb[0].mxu0
    %v1580 = vadd.f32 0.0, %v1579
    %v1581 = vpop.f32.mrb[0].mxu0
    %v1582 = vpop.f32.mrb[0].mxu0
    %v1583 = vadd.f32 0.0, %v1582
    %v1584 = vpop.f32.mrb[0].mxu0
    %1585 = vdwg.mxu0
    %v1586 = vpack.c.bf16 %v1526, %v1523
    %v1587 = vpack.c.bf16 %v1534, %v1531
    %v1588 = vpack.c.bf16 %v1439, %v1439
    %v1590 = vpack.i.b16 %v1588, %v1588
    %v1592 = vlaneseq
    %v1593 = vshrl.u32 %v1592, 7
    %v1594 = vsub.s32 0, %v1593
    %v1595 = vrot.slane %v1590, %v1594
    %v1596 = vadd.bf16 %v1586, %v1595
    %v1597 = vadd.bf16 %v1587, %v1595
    %v1598 = vtanh.bf16.pop %v1596
    %v1599 = vtanh.bf16.pop %v1597
    %v1600 = vpack.c.bf16 %v1575, %v1572
    %v1601 = vpack.c.bf16 %v1583, %v1580
    %v1602 = vadd.bf16 %v1600, %v1595
    %v1603 = vadd.bf16 %v1601, %v1595
    %v1604 = vtanh.bf16.pop %v1602
    %v1605 = vtanh.bf16.pop %v1603
    %s1606 = scalar_lea.vmem [#allocation5], 1792
    %v1607 = vld [vmem:[%s1606] sm:$0xf]
    %v1608 = vld [vmem:[%s1606 + $0x8] sm:$0xf]
    %v1609 = vld [vmem:[%s1606 + $0x10] sm:$0xf]
    %v1610 = vld [vmem:[%s1606 + $0x18] sm:$0xf]
    %v1611 = vld [vmem:[%s1606 + $0x20] sm:$0xf]
    %v1612 = vld [vmem:[%s1606 + $0x28] sm:$0xf]
    %v1613 = vld [vmem:[%s1606 + $0x30] sm:$0xf]
    %v1614 = vld [vmem:[%s1606 + $0x38] sm:$0xf]
    %v1615 = vld [vmem:[%s1606 + $0x40] sm:$0xf]
    %v1616 = vld [vmem:[%s1606 + $0x48] sm:$0xf]
    %v1617 = vld [vmem:[%s1606 + $0x50] sm:$0xf]
    %v1618 = vld [vmem:[%s1606 + $0x58] sm:$0xf]
    %v1619 = vld [vmem:[%s1606 + $0x60] sm:$0xf]
    %v1620 = vld [vmem:[%s1606 + $0x68] sm:$0xf]
    %v1621 = vld [vmem:[%s1606 + $0x70] sm:$0xf]
    %v1622 = vld [vmem:[%s1606 + $0x78] sm:$0xf]
    %s1623 = scalar_lea.vmem [#allocation7], 14
    %v1624 = vld [vmem:[%s1623] sm:$0x1]
    %v1641 = vunpack.c.l.b16 %v1607
    %v1642 = vunpack.c.l.b16 %v1608
    %v1643 = vunpack.c.l.b16 %v1609
    %v1644 = vunpack.c.l.b16 %v1610
    %v1645 = vunpack.c.l.b16 %v1611
    %v1646 = vunpack.c.l.b16 %v1612
    %v1647 = vunpack.c.l.b16 %v1613
    %v1648 = vunpack.c.l.b16 %v1614
    %v1649 = vunpack.c.l.b16 %v1615
    %v1650 = vunpack.c.l.b16 %v1616
    %v1651 = vunpack.c.l.b16 %v1617
    %v1652 = vunpack.c.l.b16 %v1618
    %v1653 = vunpack.c.l.b16 %v1619
    %v1654 = vunpack.c.l.b16 %v1620
    %v1655 = vunpack.c.l.b16 %v1621
    %v1656 = vunpack.c.l.b16 %v1622
    %v1657 = vpack.c.b16 %v1642, %v1641
    %v1658 = vpack.c.b16 %v1644, %v1643
    %v1659 = vpack.c.b16 %v1646, %v1645
    %v1660 = vpack.c.b16 %v1648, %v1647
    %v1661 = vpack.c.b16 %v1650, %v1649
    %v1662 = vpack.c.b16 %v1652, %v1651
    %v1663 = vpack.c.b16 %v1654, %v1653
    %v1664 = vpack.c.b16 %v1656, %v1655
    %1673 = vmatprep.subr.bf16.mxu0 0
    %1674 = vmatpush1.bf16.msra.mxu0 %v1657
    %1675 = vmatprep.subr.bf16.mxu0 0
    %1676 = vmatpush1.bf16.msra.mxu0 %v1658
    %1677 = vmatprep.subr.bf16.mxu0 0
    %1678 = vmatpush1.bf16.msra.mxu0 %v1659
    %1679 = vmatprep.subr.bf16.mxu0 0
    %1680 = vmatpush1.bf16.msra.mxu0 %v1660
    %1681 = vmatprep.subr.bf16.mxu0 0
    %1682 = vmatpush1.bf16.msra.mxu0 %v1661
    %1683 = vmatprep.subr.bf16.mxu0 0
    %1684 = vmatpush1.bf16.msra.mxu0 %v1662
    %1685 = vmatprep.subr.bf16.mxu0 0
    %1686 = vmatpush1.bf16.msra.mxu0 %v1663
    %1687 = vmatprep.subr.bf16.mxu0 0
    %1688 = vmatpush1.bf16.msra.mxu0 %v1664
    %1689 = vmatprep.subr.bf16.mxu0 0
    %1690 = vmatpush1.bf16.msra.mxu0 0
    %1691 = vmatprep.subr.bf16.mxu0 0
    %1692 = vmatpush1.bf16.msra.mxu0 0
    %1693 = vmatprep.subr.bf16.mxu0 0
    %1694 = vmatpush1.bf16.msra.mxu0 0
    %1695 = vmatprep.subr.bf16.mxu0 0
    %1696 = vmatpush1.bf16.msra.mxu0 0
    %1697 = vmatprep.subr.bf16.mxu0 0
    %1698 = vmatpush1.bf16.msra.mxu0 0
    %1699 = vmatprep.subr.bf16.mxu0 0
    %1700 = vmatpush1.bf16.msra.mxu0 0
    %1701 = vmatprep.subr.bf16.mxu0 0
    %1702 = vmatpush1.bf16.msra.mxu0 0
    %1703 = vmatprep.subr.bf16.mxu0 0
    %1704 = vmatpush1.bf16.msra.mxu0 0
    %1705 = vmatprep.mubr.bf16.mxu0 0
    %1706 = vmatmul.mubr.bf16.gmra.mrb[0].mxu0 %v1598
    %v1707 = vpop.f32.mrb[0].mxu0
    %v1708 = vadd.f32 0.0, %v1707
    %v1709 = vpop.f32.mrb[0].mxu0
    %v1710 = vpop.f32.mrb[0].mxu0
    %v1711 = vadd.f32 0.0, %v1710
    %v1712 = vpop.f32.mrb[0].mxu0
    %1713 = vmatprep.mubr.bf16.mxu0 0
    %1714 = vmatmul.mubr.bf16.gmra.mrb[0].mxu0 %v1599
    %v1715 = vpop.f32.mrb[0].mxu0
    %v1716 = vadd.f32 0.0, %v1715
    %v1717 = vpop.f32.mrb[0].mxu0
    %v1718 = vpop.f32.mrb[0].mxu0
    %v1719 = vadd.f32 0.0, %v1718
    %v1720 = vpop.f32.mrb[0].mxu0
    %1721 = vdwg.mxu0
    %1722 = vmatprep.subr.bf16.mxu0 0
    %1723 = vmatpush1.bf16.msra.mxu0 %v1657
    %1724 = vmatprep.subr.bf16.mxu0 0
    %1725 = vmatpush1.bf16.msra.mxu0 %v1658
    %1726 = vmatprep.subr.bf16.mxu0 0
    %1727 = vmatpush1.bf16.msra.mxu0 %v1659
    %1728 = vmatprep.subr.bf16.mxu0 0
    %1729 = vmatpush1.bf16.msra.mxu0 %v1660
    %1730 = vmatprep.subr.bf16.mxu0 0
    %1731 = vmatpush1.bf16.msra.mxu0 %v1661
    %1732 = vmatprep.subr.bf16.mxu0 0
    %1733 = vmatpush1.bf16.msra.mxu0 %v1662
    %1734 = vmatprep.subr.bf16.mxu0 0
    %1735 = vmatpush1.bf16.msra.mxu0 %v1663
    %1736 = vmatprep.subr.bf16.mxu0 0
    %1737 = vmatpush1.bf16.msra.mxu0 %v1664
    %1738 = vmatprep.subr.bf16.mxu0 0
    %1739 = vmatpush1.bf16.msra.mxu0 0
    %1740 = vmatprep.subr.bf16.mxu0 0
    %1741 = vmatpush1.bf16.msra.mxu0 0
    %1742 = vmatprep.subr.bf16.mxu0 0
    %1743 = vmatpush1.bf16.msra.mxu0 0
    %1744 = vmatprep.subr.bf16.mxu0 0
    %1745 = vmatpush1.bf16.msra.mxu0 0
    %1746 = vmatprep.subr.bf16.mxu0 0
    %1747 = vmatpush1.bf16.msra.mxu0 0
    %1748 = vmatprep.subr.bf16.mxu0 0
    %1749 = vmatpush1.bf16.msra.mxu0 0
    %1750 = vmatprep.subr.bf16.mxu0 0
    %1751 = vmatpush1.bf16.msra.mxu0 0
    %1752 = vmatprep.subr.bf16.mxu0 0
    %1753 = vmatpush1.bf16.msra.mxu0 0
    %1754 = vmatprep.mubr.bf16.mxu0 0
    %1755 = vmatmul.mubr.bf16.gmra.mrb[0].mxu0 %v1604
    %v1756 = vpop.f32.mrb[0].mxu0
    %v1757 = vadd.f32 0.0, %v1756
    %v1758 = vpop.f32.mrb[0].mxu0
    %v1759 = vpop.f32.mrb[0].mxu0
    %v1760 = vadd.f32 0.0, %v1759
    %v1761 = vpop.f32.mrb[0].mxu0
    %1762 = vmatprep.mubr.bf16.mxu0 0
    %1763 = vmatmul.mubr.bf16.gmra.mrb[0].mxu0 %v1605
    %v1764 = vpop.f32.mrb[0].mxu0
    %v1765 = vadd.f32 0.0, %v1764
    %v1766 = vpop.f32.mrb[0].mxu0
    %v1767 = vpop.f32.mrb[0].mxu0
    %v1768 = vadd.f32 0.0, %v1767
    %v1769 = vpop.f32.mrb[0].mxu0
    %1770 = vdwg.mxu0
    %v1771 = vpack.c.bf16 %v1711, %v1708
    %v1772 = vpack.c.bf16 %v1719, %v1716
    %v1773 = vpack.c.bf16 %v1624, %v1624
    %v1775 = vpack.i.b16 %v1773, %v1773
    %v1777 = vlaneseq
    %v1778 = vshrl.u32 %v1777, 7
    %v1779 = vsub.s32 0, %v1778
    %v1780 = vrot.slane %v1775, %v1779
    %v1781 = vadd.bf16 %v1771, %v1780
    %v1782 = vadd.bf16 %v1772, %v1780
    %v1783 = vtanh.bf16.pop %v1781
    %v1784 = vtanh.bf16.pop %v1782
    %v1785 = vpack.c.bf16 %v1760, %v1757
    %v1786 = vpack.c.bf16 %v1768, %v1765
    %v1787 = vadd.bf16 %v1785, %v1780
    %v1788 = vadd.bf16 %v1786, %v1780
    %v1789 = vtanh.bf16.pop %v1787
    %v1790 = vtanh.bf16.pop %v1788
    %s1791 = scalar_lea.vmem [#allocation5], 2048
    %v1792 = vld [vmem:[%s1791] sm:$0xf]
    %v1793 = vld [vmem:[%s1791 + $0x8] sm:$0xf]
    %v1794 = vld [vmem:[%s1791 + $0x10] sm:$0xf]
    %v1795 = vld [vmem:[%s1791 + $0x18] sm:$0xf]
    %v1796 = vld [vmem:[%s1791 + $0x20] sm:$0xf]
    %v1797 = vld [vmem:[%s1791 + $0x28] sm:$0xf]
    %v1798 = vld [vmem:[%s1791 + $0x30] sm:$0xf]
    %v1799 = vld [vmem:[%s1791 + $0x38] sm:$0xf]
    %v1800 = vld [vmem:[%s1791 + $0x40] sm:$0xf]
    %v1801 = vld [vmem:[%s1791 + $0x48] sm:$0xf]
    %v1802 = vld [vmem:[%s1791 + $0x50] sm:$0xf]
    %v1803 = vld [vmem:[%s1791 + $0x58] sm:$0xf]
    %v1804 = vld [vmem:[%s1791 + $0x60] sm:$0xf]
    %v1805 = vld [vmem:[%s1791 + $0x68] sm:$0xf]
    %v1806 = vld [vmem:[%s1791 + $0x70] sm:$0xf]
    %v1807 = vld [vmem:[%s1791 + $0x78] sm:$0xf]
    %s1808 = scalar_lea.vmem [#allocation7], 16
    %v1809 = vld [vmem:[%s1808] sm:$0x1]
    %v1826 = vunpack.c.l.b16 %v1792
    %v1827 = vunpack.c.l.b16 %v1793
    %v1828 = vunpack.c.l.b16 %v1794
    %v1829 = vunpack.c.l.b16 %v1795
    %v1830 = vunpack.c.l.b16 %v1796
    %v1831 = vunpack.c.l.b16 %v1797
    %v1832 = vunpack.c.l.b16 %v1798
    %v1833 = vunpack.c.l.b16 %v1799
    %v1834 = vunpack.c.l.b16 %v1800
    %v1835 = vunpack.c.l.b16 %v1801
    %v1836 = vunpack.c.l.b16 %v1802
    %v1837 = vunpack.c.l.b16 %v1803
    %v1838 = vunpack.c.l.b16 %v1804
    %v1839 = vunpack.c.l.b16 %v1805
    %v1840 = vunpack.c.l.b16 %v1806
    %v1841 = vunpack.c.l.b16 %v1807
    %v1842 = vpack.c.b16 %v1827, %v1826
    %v1843 = vpack.c.b16 %v1829, %v1828
    %v1844 = vpack.c.b16 %v1831, %v1830
    %v1845 = vpack.c.b16 %v1833, %v1832
    %v1846 = vpack.c.b16 %v1835, %v1834
    %v1847 = vpack.c.b16 %v1837, %v1836
    %v1848 = vpack.c.b16 %v1839, %v1838
    %v1849 = vpack.c.b16 %v1841, %v1840
    %1858 = vmatprep.subr.bf16.mxu0 0
    %1859 = vmatpush1.bf16.msra.mxu0 %v1842
    %1860 = vmatprep.subr.bf16.mxu0 0
    %1861 = vmatpush1.bf16.msra.mxu0 %v1843
    %1862 = vmatprep.subr.bf16.mxu0 0
    %1863 = vmatpush1.bf16.msra.mxu0 %v1844
    %1864 = vmatprep.subr.bf16.mxu0 0
    %1865 = vmatpush1.bf16.msra.mxu0 %v1845
    %1866 = vmatprep.subr.bf16.mxu0 0
    %1867 = vmatpush1.bf16.msra.mxu0 %v1846
    %1868 = vmatprep.subr.bf16.mxu0 0
    %1869 = vmatpush1.bf16.msra.mxu0 %v1847
    %1870 = vmatprep.subr.bf16.mxu0 0
    %1871 = vmatpush1.bf16.msra.mxu0 %v1848
    %1872 = vmatprep.subr.bf16.mxu0 0
    %1873 = vmatpush1.bf16.msra.mxu0 %v1849
    %1874 = vmatprep.subr.bf16.mxu0 0
    %1875 = vmatpush1.bf16.msra.mxu0 0
    %1876 = vmatprep.subr.bf16.mxu0 0
    %1877 = vmatpush1.bf16.msra.mxu0 0
    %1878 = vmatprep.subr.bf16.mxu0 0
    %1879 = vmatpush1.bf16.msra.mxu0 0
    %1880 = vmatprep.subr.bf16.mxu0 0
    %1881 = vmatpush1.bf16.msra.mxu0 0
    %1882 = vmatprep.subr.bf16.mxu0 0
    %1883 = vmatpush1.bf16.msra.mxu0 0
    %1884 = vmatprep.subr.bf16.mxu0 0
    %1885 = vmatpush1.bf16.msra.mxu0 0
    %1886 = vmatprep.subr.bf16.mxu0 0
    %1887 = vmatpush1.bf16.msra.mxu0 0
    %1888 = vmatprep.subr.bf16.mxu0 0
    %1889 = vmatpush1.bf16.msra.mxu0 0
    %1890 = vmatprep.mubr.bf16.mxu0 0
    %1891 = vmatmul.mubr.bf16.gmra.mrb[0].mxu0 %v1783
    %v1892 = vpop.f32.mrb[0].mxu0
    %v1893 = vadd.f32 0.0, %v1892
    %v1894 = vpop.f32.mrb[0].mxu0
    %v1895 = vpop.f32.mrb[0].mxu0
    %v1896 = vadd.f32 0.0, %v1895
    %v1897 = vpop.f32.mrb[0].mxu0
    %1898 = vmatprep.mubr.bf16.mxu0 0
    %1899 = vmatmul.mubr.bf16.gmra.mrb[0].mxu0 %v1784
    %v1900 = vpop.f32.mrb[0].mxu0
    %v1901 = vadd.f32 0.0, %v1900
    %v1902 = vpop.f32.mrb[0].mxu0
    %v1903 = vpop.f32.mrb[0].mxu0
    %v1904 = vadd.f32 0.0, %v1903
    %v1905 = vpop.f32.mrb[0].mxu0
    %1906 = vdwg.mxu0
    %1907 = vmatprep.subr.bf16.mxu0 0
    %1908 = vmatpush1.bf16.msra.mxu0 %v1842
    %1909 = vmatprep.subr.bf16.mxu0 0
    %1910 = vmatpush1.bf16.msra.mxu0 %v1843
    %1911 = vmatprep.subr.bf16.mxu0 0
    %1912 = vmatpush1.bf16.msra.mxu0 %v1844
    %1913 = vmatprep.subr.bf16.mxu0 0
    %1914 = vmatpush1.bf16.msra.mxu0 %v1845
    %1915 = vmatprep.subr.bf16.mxu0 0
    %1916 = vmatpush1.bf16.msra.mxu0 %v1846
    %1917 = vmatprep.subr.bf16.mxu0 0
    %1918 = vmatpush1.bf16.msra.mxu0 %v1847
    %1919 = vmatprep.subr.bf16.mxu0 0
    %1920 = vmatpush1.bf16.msra.mxu0 %v1848
    %1921 = vmatprep.subr.bf16.mxu0 0
    %1922 = vmatpush1.bf16.msra.mxu0 %v1849
    %1923 = vmatprep.subr.bf16.mxu0 0
    %1924 = vmatpush1.bf16.msra.mxu0 0
    %1925 = vmatprep.subr.bf16.mxu0 0
    %1926 = vmatpush1.bf16.msra.mxu0 0
    %1927 = vmatprep.subr.bf16.mxu0 0
    %1928 = vmatpush1.bf16.msra.mxu0 0
    %1929 = vmatprep.subr.bf16.mxu0 0
    %1930 = vmatpush1.bf16.msra.mxu0 0
    %1931 = vmatprep.subr.bf16.mxu0 0
    %1932 = vmatpush1.bf16.msra.mxu0 0
    %1933 = vmatprep.subr.bf16.mxu0 0
    %1934 = vmatpush1.bf16.msra.mxu0 0
    %1935 = vmatprep.subr.bf16.mxu0 0
    %1936 = vmatpush1.bf16.msra.mxu0 0
    %1937 = vmatprep.subr.bf16.mxu0 0
    %1938 = vmatpush1.bf16.msra.mxu0 0
    %1939 = vmatprep.mubr.bf16.mxu0 0
    %1940 = vmatmul.mubr.bf16.gmra.mrb[0].mxu0 %v1789
    %v1941 = vpop.f32.mrb[0].mxu0
    %v1942 = vadd.f32 0.0, %v1941
    %v1943 = vpop.f32.mrb[0].mxu0
    %v1944 = vpop.f32.mrb[0].mxu0
    %v1945 = vadd.f32 0.0, %v1944
    %v1946 = vpop.f32.mrb[0].mxu0
    %1947 = vmatprep.mubr.bf16.mxu0 0
    %1948 = vmatmul.mubr.bf16.gmra.mrb[0].mxu0 %v1790
    %v1949 = vpop.f32.mrb[0].mxu0
    %v1950 = vadd.f32 0.0, %v1949
    %v1951 = vpop.f32.mrb[0].mxu0
    %v1952 = vpop.f32.mrb[0].mxu0
    %v1953 = vadd.f32 0.0, %v1952
    %v1954 = vpop.f32.mrb[0].mxu0
    %1955 = vdwg.mxu0
    %v1956 = vpack.c.bf16 %v1896, %v1893
    %v1957 = vpack.c.bf16 %v1904, %v1901
    %v1958 = vpack.c.bf16 %v1809, %v1809
    %v1960 = vpack.i.b16 %v1958, %v1958
    %v1962 = vlaneseq
    %v1963 = vshrl.u32 %v1962, 7
    %v1964 = vsub.s32 0, %v1963
    %v1965 = vrot.slane %v1960, %v1964
    %v1966 = vadd.bf16 %v1956, %v1965
    %v1967 = vadd.bf16 %v1957, %v1965
    %v1968 = vtanh.bf16.pop %v1966
    %v1969 = vtanh.bf16.pop %v1967
    %v1970 = vpack.c.bf16 %v1945, %v1942
    %v1971 = vpack.c.bf16 %v1953, %v1950
    %v1972 = vadd.bf16 %v1970, %v1965
    %v1973 = vadd.bf16 %v1971, %v1965
    %v1974 = vtanh.bf16.pop %v1972
    %v1975 = vtanh.bf16.pop %v1973
    %s1976 = scalar_lea.vmem [#allocation5], 2304
    %v1977 = vld [vmem:[%s1976] sm:$0xff]
    %v1978 = vld [vmem:[%s1976 + $0x8] sm:$0xff]
    %v1979 = vld [vmem:[%s1976 + $0x10] sm:$0xff]
    %v1980 = vld [vmem:[%s1976 + $0x18] sm:$0xff]
    %v1981 = vld [vmem:[%s1976 + $0x20] sm:$0xff]
    %v1982 = vld [vmem:[%s1976 + $0x28] sm:$0xff]
    %v1983 = vld [vmem:[%s1976 + $0x30] sm:$0xff]
    %v1984 = vld [vmem:[%s1976 + $0x38] sm:$0xff]
    %v1985 = vld [vmem:[%s1976 + $0x40] sm:$0xff]
    %v1986 = vld [vmem:[%s1976 + $0x48] sm:$0xff]
    %v1987 = vld [vmem:[%s1976 + $0x50] sm:$0xff]
    %v1988 = vld [vmem:[%s1976 + $0x58] sm:$0xff]
    %v1989 = vld [vmem:[%s1976 + $0x60] sm:$0xff]
    %v1990 = vld [vmem:[%s1976 + $0x68] sm:$0xff]
    %v1991 = vld [vmem:[%s1976 + $0x70] sm:$0xff]
    %v1992 = vld [vmem:[%s1976 + $0x78] sm:$0xff]
    %s1993 = scalar_lea.vmem [#allocation7], 18
    %v1994 = vld [vmem:[%s1993] sm:$0x3]
    %v1996 = vlaneseq
    %v1997 = vshrl.u32 %v1996, 7
    %v1998 = vsub.s32 0, %v1997
    %v1999 = vrot.slane %v1994, %v1998
    %v2000 = vlaneseq
    %v2001 = vshrl.u32 %v2000, 7
    %v2002 = vsub.s32 1, %v2001
    %v2003 = vrot.slane %v1994, %v2002
    %v2022 = vunpack.c.l.b16 %v1977
    %v2023 = vunpack.c.h.b16 %v1977
    %v2024 = vunpack.c.l.b16 %v1978
    %v2025 = vunpack.c.h.b16 %v1978
    %v2026 = vunpack.c.l.b16 %v1979
    %v2027 = vunpack.c.h.b16 %v1979
    %v2028 = vunpack.c.l.b16 %v1980
    %v2029 = vunpack.c.h.b16 %v1980
    %v2030 = vunpack.c.l.b16 %v1981
    %v2031 = vunpack.c.h.b16 %v1981
    %v2032 = vunpack.c.l.b16 %v1982
    %v2033 = vunpack.c.h.b16 %v1982
    %v2034 = vunpack.c.l.b16 %v1983
    %v2035 = vunpack.c.h.b16 %v1983
    %v2036 = vunpack.c.l.b16 %v1984
    %v2037 = vunpack.c.h.b16 %v1984
    %v2038 = vunpack.c.l.b16 %v1985
    %v2039 = vunpack.c.h.b16 %v1985
    %v2040 = vunpack.c.l.b16 %v1986
    %v2041 = vunpack.c.h.b16 %v1986
    %v2042 = vunpack.c.l.b16 %v1987
    %v2043 = vunpack.c.h.b16 %v1987
    %v2044 = vunpack.c.l.b16 %v1988
    %v2045 = vunpack.c.h.b16 %v1988
    %v2046 = vunpack.c.l.b16 %v1989
    %v2047 = vunpack.c.h.b16 %v1989
    %v2048 = vunpack.c.l.b16 %v1990
    %v2049 = vunpack.c.h.b16 %v1990
    %v2050 = vunpack.c.l.b16 %v1991
    %v2051 = vunpack.c.h.b16 %v1991
    %v2052 = vunpack.c.l.b16 %v1992
    %v2053 = vunpack.c.h.b16 %v1992
    %v2054 = vpack.c.b16 %v2024, %v2022
    %v2055 = vpack.c.b16 %v2025, %v2023
    %v2056 = vpack.c.b16 %v2028, %v2026
    %v2057 = vpack.c.b16 %v2029, %v2027
    %v2058 = vpack.c.b16 %v2032, %v2030
    %v2059 = vpack.c.b16 %v2033, %v2031
    %v2060 = vpack.c.b16 %v2036, %v2034
    %v2061 = vpack.c.b16 %v2037, %v2035
    %v2062 = vpack.c.b16 %v2040, %v2038
    %v2063 = vpack.c.b16 %v2041, %v2039
    %v2064 = vpack.c.b16 %v2044, %v2042
    %v2065 = vpack.c.b16 %v2045, %v2043
    %v2066 = vpack.c.b16 %v2048, %v2046
    %v2067 = vpack.c.b16 %v2049, %v2047
    %v2068 = vpack.c.b16 %v2052, %v2050
    %v2069 = vpack.c.b16 %v2053, %v2051
    %2086 = vmatprep.subr.bf16.mxu0 %v2055
    %2087 = vmatpush1.bf16.msra.mxu0 %v2054
    %2088 = vmatprep.subr.bf16.mxu0 %v2057
    %2089 = vmatpush1.bf16.msra.mxu0 %v2056
    %2090 = vmatprep.subr.bf16.mxu0 %v2059
    %2091 = vmatpush1.bf16.msra.mxu0 %v2058
    %2092 = vmatprep.subr.bf16.mxu0 %v2061
    %2093 = vmatpush1.bf16.msra.mxu0 %v2060
    %2094 = vmatprep.subr.bf16.mxu0 %v2063
    %2095 = vmatpush1.bf16.msra.mxu0 %v2062
    %2096 = vmatprep.subr.bf16.mxu0 %v2065
    %2097 = vmatpush1.bf16.msra.mxu0 %v2064
    %2098 = vmatprep.subr.bf16.mxu0 %v2067
    %2099 = vmatpush1.bf16.msra.mxu0 %v2066
    %2100 = vmatprep.subr.bf16.mxu0 %v2069
    %2101 = vmatpush1.bf16.msra.mxu0 %v2068
    %2102 = vmatprep.subr.bf16.mxu0 0
    %2103 = vmatpush1.bf16.msra.mxu0 0
    %2104 = vmatprep.subr.bf16.mxu0 0
    %2105 = vmatpush1.bf16.msra.mxu0 0
    %2106 = vmatprep.subr.bf16.mxu0 0
    %2107 = vmatpush1.bf16.msra.mxu0 0
    %2108 = vmatprep.subr.bf16.mxu0 0
    %2109 = vmatpush1.bf16.msra.mxu0 0
    %2110 = vmatprep.subr.bf16.mxu0 0
    %2111 = vmatpush1.bf16.msra.mxu0 0
    %2112 = vmatprep.subr.bf16.mxu0 0
    %2113 = vmatpush1.bf16.msra.mxu0 0
    %2114 = vmatprep.subr.bf16.mxu0 0
    %2115 = vmatpush1.bf16.msra.mxu0 0
    %2116 = vmatprep.subr.bf16.mxu0 0
    %2117 = vmatpush1.bf16.msra.mxu0 0
    %2118 = vmatprep.mubr.bf16.mxu0 0
    %2119 = vmatmul.mubr.bf16.gmra.mrb[0].mxu0 %v1968
    %v2120 = vpop.f32.mrb[0].mxu0
    %v2121 = vadd.f32 %v1999, %v2120
    %v2122 = vpop.f32.mrb[0].mxu0
    %v2123 = vadd.f32 %v2003, %v2122
    %v2124 = vpop.f32.mrb[0].mxu0
    %v2125 = vadd.f32 %v1999, %v2124
    %v2126 = vpop.f32.mrb[0].mxu0
    %v2127 = vadd.f32 %v2003, %v2126
    %2128 = vmatprep.mubr.bf16.mxu0 0
    %2129 = vmatmul.mubr.bf16.gmra.mrb[0].mxu0 %v1969
    %v2130 = vpop.f32.mrb[0].mxu0
    %v2131 = vadd.f32 %v1999, %v2130
    %v2132 = vpop.f32.mrb[0].mxu0
    %v2133 = vadd.f32 %v2003, %v2132
    %v2134 = vpop.f32.mrb[0].mxu0
    %v2135 = vadd.f32 %v1999, %v2134
    %v2136 = vpop.f32.mrb[0].mxu0
    %v2137 = vadd.f32 %v2003, %v2136
    %2138 = vdwg.mxu0
    %2139 = vst [vmem:[#allocation9] sm:$0xff] %v2121
    %2140 = vst [vmem:[#allocation9 + $0x8] sm:$0xff] %v2123
    %2141 = vst [vmem:[#allocation9 + $0x10] sm:$0xff] %v2125
    %2142 = vst [vmem:[#allocation9 + $0x18] sm:$0xff] %v2127
    %2143 = vst [vmem:[#allocation9 + $0x20] sm:$0xff] %v2131
    %2144 = vst [vmem:[#allocation9 + $0x28] sm:$0xff] %v2133
    %2145 = vst [vmem:[#allocation9 + $0x30] sm:$0xff] %v2135
    %2146 = vst [vmem:[#allocation9 + $0x38] sm:$0xff] %v2137
    %2147 = vmatprep.subr.bf16.mxu0 %v2055
    %2148 = vmatpush1.bf16.msra.mxu0 %v2054
    %2149 = vmatprep.subr.bf16.mxu0 %v2057
    %2150 = vmatpush1.bf16.msra.mxu0 %v2056
    %2151 = vmatprep.subr.bf16.mxu0 %v2059
    %2152 = vmatpush1.bf16.msra.mxu0 %v2058
    %2153 = vmatprep.subr.bf16.mxu0 %v2061
    %2154 = vmatpush1.bf16.msra.mxu0 %v2060
    %2155 = vmatprep.subr.bf16.mxu0 %v2063
    %2156 = vmatpush1.bf16.msra.mxu0 %v2062
    %2157 = vmatprep.subr.bf16.mxu0 %v2065
    %2158 = vmatpush1.bf16.msra.mxu0 %v2064
    %2159 = vmatprep.subr.bf16.mxu0 %v2067
    %2160 = vmatpush1.bf16.msra.mxu0 %v2066
    %2161 = vmatprep.subr.bf16.mxu0 %v2069
    %2162 = vmatpush1.bf16.msra.mxu0 %v2068
    %2163 = vmatprep.subr.bf16.mxu0 0
    %2164 = vmatpush1.bf16.msra.mxu0 0
    %2165 = vmatprep.subr.bf16.mxu0 0
    %2166 = vmatpush1.bf16.msra.mxu0 0
    %2167 = vmatprep.subr.bf16.mxu0 0
    %2168 = vmatpush1.bf16.msra.mxu0 0
    %2169 = vmatprep.subr.bf16.mxu0 0
    %2170 = vmatpush1.bf16.msra.mxu0 0
    %2171 = vmatprep.subr.bf16.mxu0 0
    %2172 = vmatpush1.bf16.msra.mxu0 0
    %2173 = vmatprep.subr.bf16.mxu0 0
    %2174 = vmatpush1.bf16.msra.mxu0 0
    %2175 = vmatprep.subr.bf16.mxu0 0
    %2176 = vmatpush1.bf16.msra.mxu0 0
    %2177 = vmatprep.subr.bf16.mxu0 0
    %2178 = vmatpush1.bf16.msra.mxu0 0
    %2179 = vmatprep.mubr.bf16.mxu0 0
    %2180 = vmatmul.mubr.bf16.gmra.mrb[0].mxu0 %v1974
    %v2181 = vpop.f32.mrb[0].mxu0
    %v2182 = vadd.f32 %v1999, %v2181
    %v2183 = vpop.f32.mrb[0].mxu0
    %v2184 = vadd.f32 %v2003, %v2183
    %v2185 = vpop.f32.mrb[0].mxu0
    %v2186 = vadd.f32 %v1999, %v2185
    %v2187 = vpop.f32.mrb[0].mxu0
    %v2188 = vadd.f32 %v2003, %v2187
    %2189 = vmatprep.mubr.bf16.mxu0 0
    %2190 = vmatmul.mubr.bf16.gmra.mrb[0].mxu0 %v1975
    %v2191 = vpop.f32.mrb[0].mxu0
    %v2192 = vadd.f32 %v1999, %v2191
    %v2193 = vpop.f32.mrb[0].mxu0
    %v2194 = vadd.f32 %v2003, %v2193
    %v2195 = vpop.f32.mrb[0].mxu0
    %v2196 = vadd.f32 %v1999, %v2195
    %v2197 = vpop.f32.mrb[0].mxu0
    %v2198 = vadd.f32 %v2003, %v2197
    %2199 = vdwg.mxu0
    %2200 = vst [vmem:[#allocation9 + $0x40] sm:$0xff] %v2182
    %2201 = vst [vmem:[#allocation9 + $0x48] sm:$0xff] %v2184
    %2202 = vst [vmem:[#allocation9 + $0x50] sm:$0xff] %v2186
    %2203 = vst [vmem:[#allocation9 + $0x58] sm:$0xff] %v2188
    %2204 = vst [vmem:[#allocation9 + $0x60] sm:$0xff] %v2192
    %2205 = vst [vmem:[#allocation9 + $0x68] sm:$0xff] %v2194
    %2206 = vst [vmem:[#allocation9 + $0x70] sm:$0xff] %v2196
    %2207 = vst [vmem:[#allocation9 + $0x78] sm:$0xff] %v2198
    // Predicated region
    $region26: #{tpu_custom_call.1} parent=1 // pred_check
      _
    $region27: #{tpu_custom_call.1} parent=1 // pred_check_branch
      %2209 = sbr.rel (0) target = $region29
    $region28: #{tpu_custom_call.1} parent=1 // pred_region
      %s2211 = ssub.s32 1024, 1024
      %2212 = vsyncadd [#allocation4], %s2211
      %s2213 = sshll.u32 [#allocation8], 4
      %s2214 = int_to_ptr.vmem [resolvable:$true] %s2213
      %2219 = dma.vmem_to_hbm [thread:$0]  %s2214, 1024, %s3, [#allocation4], 128, 128, 8
    $region29: #{tpu_custom_call.1} parent=1 // pred_fallthru
      _
    // Predicated region
    $region30: #{tpu_custom_call.1} parent=1 // pred_check
      _
    $region31: #{tpu_custom_call.1} parent=1 // pred_check_branch
      %2221 = sbr.rel (0) target = $region33
    $region32: #{tpu_custom_call.1} parent=1 // pred_region
      %s2223 = ssub.s32 2048, 2048
      %2224 = vsyncadd [#allocation10], %s2223
      %s2225 = sshll.u32 [#allocation9], 4
      %s2226 = int_to_ptr.vmem [resolvable:$true] %s2225
      %2231 = dma.vmem_to_hbm [thread:$0]  %s2226, 2048, %s4, [#allocation10], 256, 256, 16
    $region33: #{tpu_custom_call.1} parent=1 // pred_fallthru
      _
    // Predicated region
    $region34: #{tpu_custom_call.1} parent=1 // pred_check
      _
    $region35: #{tpu_custom_call.1} parent=1 // pred_check_branch
      %2233 = sbr.rel (0) target = $region37
    $region36: #{tpu_custom_call.1} parent=1 // pred_region
      %2234 = dma.done [#allocation4], 1024
    $region37: #{tpu_custom_call.1} parent=1 // pred_fallthru
      _
    // Predicated region
    $region38: #{tpu_custom_call.1} parent=1 // pred_check
      _
    $region39: #{tpu_custom_call.1} parent=1 // pred_check_branch
      %2236 = sbr.rel (0) target = $region41
    $region40: #{tpu_custom_call.1} parent=1 // pred_region
      %2237 = dma.done [#allocation10], 2048
    $region41: #{tpu_custom_call.1} parent=1 // pred_fallthru
      _
    %2238 = vsyncpa [#allocation3], 1
    %2239 = vsyncpa [#allocation6], 1
    %2240 = vsyncpa [#allocation4], 1
    %2241 = vsyncpa [#allocation10], 1

</llo_original>
